<compile_context>
chip_gen: v7x
topology: tpu7x:2x2x1
jax: 0.10.0
libtpu: 0.0.40
codegen_flags: <defaults>
</compile_context>

<pallas_src>
import functools

import jax
import jax.numpy as jnp
from jax import lax
from jax.experimental import pallas as pl
from jax.experimental.pallas import tpu as pltpu


def _round_up(a, m):
    return (a + m - 1) // m * m


def _device_kind():
    try:
        return jax.devices()[0].device_kind.lower()
    except Exception:
        return ""


def _tpu_generation():
    kind = _device_kind()
    for tag, gen in (("v7", 7), ("7x", 7), ("v6", 6), ("v5", 5), ("v4", 4)):
        if tag in kind:
            return gen
    return 0


def _vmem_capacity_bytes():
    try:
        return int(pltpu.get_tpu_info().vmem_capacity_bytes)
    except Exception:
        gen = _tpu_generation()
        if gen in (5, 6):
            return 128 * 1024 * 1024
        return 64 * 1024 * 1024          # v7x (64 MiB/TC) / unknown: conservative


def _sigmoid_tanh(x):
    # sigmoid(x) == 0.5 * (1 + tanh(0.5 * x)); one EUP push instead of exp+recip.
    return 0.5 * (jnp.tanh(0.5 * x) + 1.0)


def _pad_gate_cols(w, H, Hp):
    """(..., 4*H) -> (..., 4*Hp), zero-padding each PyTorch gate block (i,f,g,o)."""
    if Hp == H:
        return w
    lead = w.shape[:-1]
    w4 = w.reshape(lead + (4, H))
    pad = [(0, 0)] * len(lead) + [(0, 0), (0, Hp - H)]
    return jnp.pad(w4, pad).reshape(lead + (4 * Hp,))


def _pick_batch_block(Bp, target, want_two_blocks):
    nb = max(1, -(-Bp // max(8, target)))
    if want_two_blocks and Bp >= 16:
        nb = max(nb, 2)                   # keep both v7x TensorCores busy
    return _round_up(-(-Bp // nb), 8)


def _pick_time_chunk(T, Bb, D_in, Hp, Dop, x_bytes, gx_bytes, w_bytes, budget):
    """Largest time chunk that fits the VMEM budget (lane-padding aware)."""
    D_in_lanes = _round_up(D_in, 128)     # x chunk is lane-padded in VMEM
    resident = (_round_up(D_in, 8) * 4 * Hp * w_bytes   # W_ih
                + Hp * 4 * Hp * w_bytes                 # W_hh
                + 8 * 4 * Hp * 4                        # fused bias (f32)
                + Hp * Dop * w_bytes                    # W_fc
                + 8 * Dop * 4                           # b_fc
                + 2 * Bb * Hp * 4                       # h, c state
                + 2 * Bb * Dop * 4)                     # out block (2 bufs)
    per_t = Bb * (2 * D_in_lanes * x_bytes              # x chunk, 2 pipeline bufs
                  + 4 * Hp * gx_bytes)                  # gates_x scratch
    avail = max(0, budget - resident)
    tc = int(max(1, min(T, avail // max(1, per_t))))
    return tc, resident, per_t


def _lstm_kernel(x_ref, wih_hbm, whh_hbm, b_hbm, wfc_hbm, bfc_hbm,
                 out_ref,
                 wih_v, whh_v, b_v, wfc_v, bfc_v, gx_sc, h_sc, c_sc, cp_sem,
                 *, hidden_pad, time_chunk, batch_block, seq_len,
                 rec_dtype, act_dtype):
    Hp, Tc, Bb = hidden_pad, time_chunk, batch_block
    t_idx = pl.program_id(1)
    first = t_idx == 0

    def copy(i, src, dst):
        return pltpu.make_async_copy(src, dst, cp_sem.at[i])

    @pl.when(first)
    def _start_copies():
        # Loop-invariant operands: five concurrent DMAs (per batch block, so
        # this is also correct when the batch axis is split across v7x cores).
        copy(0, wih_hbm, wih_v).start()
        copy(1, b_hbm, b_v).start()
        copy(2, whh_hbm, whh_v).start()
        copy(3, wfc_hbm, wfc_v).start()
        copy(4, bfc_hbm, bfc_v).start()
        h_sc[...] = jnp.zeros_like(h_sc)
        c_sc[...] = jnp.zeros_like(c_sc)

    @pl.when(first)
    def _wait_bulk_weights():
        copy(0, wih_hbm, wih_v).wait()
        copy(1, b_hbm, b_v).wait()

    # Bulk (non-recurrent) input projection for the whole time chunk:
    #   gates_x[t*Bb + j, :] = x[t, j, :] @ W_ih^T + (b_ih + b_hh)
    x2d = x_ref[0]                                               # (Tc*Bb, D_in)
    gx_sc[...] = (jnp.dot(x2d, wih_v[...],
                          preferred_element_type=jnp.float32)
                  + b_v[...]).astype(gx_sc.dtype)

    @pl.when(first)
    def _wait_recurrent_weights():
        # Overlapped with the bulk projection above; wfc/bfc are tiny.
        copy(2, whh_hbm, whh_v).wait()
        copy(3, wfc_hbm, wfc_v).wait()
        copy(4, bfc_hbm, bfc_v).wait()

    # Ragged last chunk: padded timesteps mutate LSTM state, so they are
    # skipped via the trip count (static when Tc divides T).
    if seq_len % Tc == 0:
        steps = Tc
    else:
        steps = jnp.minimum(Tc, seq_len - t_idx * Tc)

    def step(i, carry):
        h = h_sc[...]
        c = c_sc[...]
        row = pl.multiple_of(i * Bb, Bb)
        gx = gx_sc[pl.ds(row, Bb), :].astype(jnp.float32)        # (Bb, 4*Hp)
        gates = gx + jnp.dot(h.astype(rec_dtype), whh_v[...],
                             preferred_element_type=jnp.float32)
        g = gates.astype(act_dtype)
        i_g = _sigmoid_tanh(g[:, 0 * Hp:1 * Hp]).astype(jnp.float32)
        f_g = _sigmoid_tanh(g[:, 1 * Hp:2 * Hp]).astype(jnp.float32)
        g_g = jnp.tanh(g[:, 2 * Hp:3 * Hp]).astype(jnp.float32)
        o_g = _sigmoid_tanh(g[:, 3 * Hp:4 * Hp]).astype(jnp.float32)
        c_new = f_g * c + i_g * g_g                              # f32 state
        h_new = o_g * jnp.tanh(c_new.astype(act_dtype)).astype(jnp.float32)
        c_sc[...] = c_new
        h_sc[...] = h_new
        return carry

    lax.fori_loop(0, steps, step, 0)

    @pl.when(t_idx == pl.num_programs(1) - 1)
    def _final():
        h = h_sc[...]
        y = (jnp.dot(h.astype(wfc_v.dtype), wfc_v[...],
                     preferred_element_type=jnp.float32) + bfc_v[...])
        out_ref[...] = y.astype(out_ref.dtype)


def lstm_regressor_pallas(x, params, *, precision="bf16", gate_bf16=None,
                          batch_block_target=None, time_chunk=None):
    """x: (B, T, D_in) float32 (batch_first, like PyTorch). Returns (B, D_out)."""
    x = jnp.asarray(x, jnp.float32)
    B, T, D_in = x.shape
    w_ih_t = jnp.asarray(params["w_ih_t"], jnp.float32)     # (D_in, 4H)
    w_hh_t = jnp.asarray(params["w_hh_t"], jnp.float32)     # (H, 4H)
    bias = jnp.asarray(params["bias"], jnp.float32)         # (1, 4H) = b_ih + b_hh
    w_fc_t = jnp.asarray(params["w_fc_t"], jnp.float32)     # (H, D_out)
    b_fc = jnp.asarray(params["b_fc"], jnp.float32)         # (1, D_out)

    H = w_hh_t.shape[0]
    D_out = w_fc_t.shape[1]

    gen = _tpu_generation()
    bf16_mode = (precision == "bf16")
    if gate_bf16 is None:
        gate_bf16 = bf16_mode and gen >= 6          # v6e/v7x have bf16 VPU/EUP
    if batch_block_target is None:
        batch_block_target = 256 if gen >= 6 else 128

    mxu_dtype = jnp.bfloat16 if bf16_mode else jnp.float32   # x, W_ih, W_hh, W_fc
    gx_dtype = jnp.bfloat16 if bf16_mode else jnp.float32    # gates_x scratch
    act_dtype = jnp.bfloat16 if gate_bf16 else jnp.float32   # gate activations
    # bias / b_fc / h / c / state math stay float32.

    # ---- alignment padding (exact: padded units stay identically zero) ----
    Hp = _round_up(H, 128)           # lane-aligned gate slices
    Dop = _round_up(D_out, 128)      # lane-dense output store
    Bp = _round_up(B, 8)             # full sublanes

    w_ih_p = _pad_gate_cols(w_ih_t, H, Hp).astype(mxu_dtype)                 # (D_in,4Hp)
    w_hh_p = _pad_gate_cols(jnp.pad(w_hh_t, ((0, Hp - H), (0, 0))),
                            H, Hp).astype(mxu_dtype)                         # (Hp,4Hp)
    bias_p = _pad_gate_cols(bias, H, Hp)                                     # (1,4Hp) f32
    w_fc_p = jnp.pad(w_fc_t, ((0, Hp - H), (0, Dop - D_out))).astype(mxu_dtype)
    b_fc_p = jnp.pad(b_fc, ((0, 0), (0, Dop - D_out)))                       # (1,Dop) f32

    # ---- batch blocks (>= 2 on v7x so both TensorCores get work) ----------
    Bb = _pick_batch_block(Bp, batch_block_target, want_two_blocks=(gen >= 7))
    nb = -(-Bp // Bb)
    Bp2 = nb * Bb

    # ---- generation-aware VMEM budgeting ----------------------------------
    vmem_cap = _vmem_capacity_bytes()
    vmem_limit = vmem_cap * 3 // 4
    budget = vmem_limit * 9 // 10

    x_bytes = jnp.dtype(mxu_dtype).itemsize
    gx_bytes = jnp.dtype(gx_dtype).itemsize
    Tc_auto, resident, per_t = _pick_time_chunk(
        T, Bb, D_in, Hp, Dop, x_bytes, gx_bytes, x_bytes, budget)
    Tc = min(T, time_chunk) if time_chunk is not None else Tc_auto
    nt = -(-T // Tc)
    Tp = nt * Tc
    vmem_limit = int(min(vmem_cap, max(vmem_limit, resident + per_t * Tc + (8 << 20))))

    # ---- layout: (nb, Tp*Bb, D_in), time-major inside a batch block --------
    x_tbd = jnp.transpose(x, (1, 0, 2))                             # (T, B, D_in)
    x_tbd = jnp.pad(x_tbd, ((0, Tp - T), (0, Bp2 - B), (0, 0)))     # (Tp, Bp2, D_in)
    x_blk = (x_tbd.reshape(Tp, nb, Bb, D_in)
             .transpose(1, 0, 2, 3)
             .reshape(nb, Tp * Bb, D_in)
             .astype(mxu_dtype))

    kernel = functools.partial(
        _lstm_kernel, hidden_pad=Hp, time_chunk=Tc, batch_block=Bb,
        seq_len=T, rec_dtype=mxu_dtype, act_dtype=act_dtype)

    out = pl.pallas_call(
        kernel,
        out_shape=jax.ShapeDtypeStruct((Bp2, Dop), jnp.float32),
        grid_spec=pltpu.PrefetchScalarGridSpec(
            num_scalar_prefetch=0,
            grid=(nb, nt),
            in_specs=[
                pl.BlockSpec((1, Tc * Bb, D_in), lambda b, t: (b, t, 0)),  # x chunk
                pl.BlockSpec(memory_space=pl.ANY),   # W_ih^T  (single-buffered)
                pl.BlockSpec(memory_space=pl.ANY),   # W_hh^T
                pl.BlockSpec(memory_space=pl.ANY),   # bias
                pl.BlockSpec(memory_space=pl.ANY),   # W_fc^T
                pl.BlockSpec(memory_space=pl.ANY),   # b_fc
            ],
            out_specs=pl.BlockSpec((Bb, Dop), lambda b, t: (b, 0)),
            scratch_shapes=[
                pltpu.VMEM((D_in, 4 * Hp), mxu_dtype),        # W_ih resident
                pltpu.VMEM((Hp, 4 * Hp), mxu_dtype),          # W_hh resident
                pltpu.VMEM((1, 4 * Hp), jnp.float32),         # fused bias
                pltpu.VMEM((Hp, Dop), mxu_dtype),             # W_fc resident
                pltpu.VMEM((1, Dop), jnp.float32),            # b_fc
                pltpu.VMEM((Tc * Bb, 4 * Hp), gx_dtype),      # gates_x for chunk
                pltpu.VMEM((Bb, Hp), jnp.float32),            # h state
                pltpu.VMEM((Bb, Hp), jnp.float32),            # c state
                pltpu.SemaphoreType.DMA((5,)),                # weight-copy sems
            ],
        ),
        compiler_params=pltpu.CompilerParams(
            dimension_semantics=("parallel", "arbitrary"),
            vmem_limit_bytes=vmem_limit,
        ),
    )(x_blk, w_ih_p, w_hh_p, bias_p, w_fc_p, b_fc_p)

    return out[:B, :D_out]


def make_params(key, input_dim, hidden_dim, output_dim):
    """Deterministic synthetic parameters, PyTorch-style uniform(-1/sqrt(H), 1/sqrt(H))."""
    k = 1.0 / jnp.sqrt(jnp.float32(hidden_dim))
    keys = jax.random.split(key, 6)
    u = lambda kk, shape: jax.random.uniform(kk, shape, jnp.float32, -k, k)
    w_ih = u(keys[0], (4 * hidden_dim, input_dim))    # PyTorch weight_ih_l0
    w_hh = u(keys[1], (4 * hidden_dim, hidden_dim))   # PyTorch weight_hh_l0
    b_ih = u(keys[2], (4 * hidden_dim,))
    b_hh = u(keys[3], (4 * hidden_dim,))
    w_fc = u(keys[4], (output_dim, hidden_dim))       # PyTorch fc.weight
    b_fc = u(keys[5], (output_dim,))
    return {
        "w_ih_t": w_ih.T,                             # (D_in, 4H)
        "w_hh_t": w_hh.T,                             # (H, 4H)
        "bias": (b_ih + b_hh).reshape(1, -1),         # (1, 4H)
        "w_fc_t": w_fc.T,                             # (H, D_out)
        "b_fc": b_fc.reshape(1, -1),                  # (1, D_out)
    }


def lstm_regressor_ref(x, params):
    """Pure-JAX reference matching torch.nn.LSTM + Linear semantics."""
    B, T, D_in = x.shape
    H = params["w_hh_t"].shape[0]
    h = jnp.zeros((B, H), jnp.float32)
    c = jnp.zeros((B, H), jnp.float32)

    def step(carry, x_t):
        h, c = carry
        gates = x_t @ params["w_ih_t"] + h @ params["w_hh_t"] + params["bias"]
        i = jax.nn.sigmoid(gates[:, 0 * H:1 * H])
        f = jax.nn.sigmoid(gates[:, 1 * H:2 * H])
        g = jnp.tanh(gates[:, 2 * H:3 * H])
        o = jax.nn.sigmoid(gates[:, 3 * H:4 * H])
        c = f * c + i * g
        h = o * jnp.tanh(c)
        return (h, c), None

    (h, c), _ = lax.scan(step, (h, c), jnp.transpose(x, (1, 0, 2)))
    return h @ params["w_fc_t"] + params["b_fc"]


if __name__ == "__main__":
    B, T, D_in, H, D_out = 2, 8, 1, 64, 1
    key = jax.random.PRNGKey(0)
    kx, kp = jax.random.split(key)
    x = jax.random.normal(kx, (B, T, D_in), jnp.float32)
    params = make_params(kp, D_in, H, D_out)

    ref = lstm_regressor_ref(x, params)

    # Exact f32 parity path.
    out_f32 = jax.block_until_ready(
        lstm_regressor_pallas(x, params, precision="f32", gate_bf16=False))
    assert out_f32.shape == (B, D_out), out_f32.shape
    if not jnp.allclose(out_f32, ref, atol=1e-4, rtol=1e-4):
        raise AssertionError(f"f32 mismatch: {out_f32} vs {ref}")

    # Default optimized path (bf16 recurrent MXU, per-generation bf16 gates).
    out = jax.block_until_ready(lstm_regressor_pallas(x, params))
    if not jnp.allclose(out, ref, atol=5e-2, rtol=5e-2):
        raise AssertionError(f"bf16 mismatch: {out} vs {ref}")

    # Awkward shapes: ragged time chunks + multiple / padded batch blocks.
    B2, T2 = 10, 7
    x2 = jax.random.normal(jax.random.PRNGKey(1), (B2, T2, D_in), jnp.float32)
    ref2 = lstm_regressor_ref(x2, params)
    out2 = jax.block_until_ready(
        lstm_regressor_pallas(x2, params, precision="f32", gate_bf16=False,
                              batch_block_target=8, time_chunk=3))
    if not jnp.allclose(out2, ref2, atol=1e-4, rtol=1e-4):
        raise AssertionError(f"ragged mismatch: {out2} vs {ref2}")

    print("KERNEL_OK")
</pallas_src>

<mosaic_0001>
module attributes {stable_mosaic.version = 11 : i64} {
  func.func @_lstm_kernel(%arg0: i32, %arg1: i32, %arg2: memref<1x64x1xf32, #tpu.memory_space<vmem>>, %arg3: memref<1x512xf32, #tpu.memory_space<any>>, %arg4: memref<128x512xf32, #tpu.memory_space<any>>, %arg5: memref<1x512xf32, #tpu.memory_space<any>>, %arg6: memref<128x128xf32, #tpu.memory_space<any>>, %arg7: memref<1x128xf32, #tpu.memory_space<any>>, %arg8: memref<8x128xf32, #tpu.memory_space<vmem>>, %arg9: memref<1x512xf32, #tpu.memory_space<vmem>>, %arg10: memref<128x512xf32, #tpu.memory_space<vmem>>, %arg11: memref<1x512xf32, #tpu.memory_space<vmem>>, %arg12: memref<128x128xf32, #tpu.memory_space<vmem>>, %arg13: memref<1x128xf32, #tpu.memory_space<vmem>>, %arg14: memref<64x512xf32, #tpu.memory_space<vmem>>, %arg15: memref<8x128xf32, #tpu.memory_space<vmem>>, %arg16: memref<8x128xf32, #tpu.memory_space<vmem>>, %arg17: memref<5x!tpu.dma_semaphore, #tpu.memory_space<semaphore_mem>>) attributes {dimension_semantics = [#tpu.dimension_semantics<parallel>, #tpu.dimension_semantics<arbitrary>], iteration_bounds = array<i64: 1, 1>, scalar_prefetch = 0 : i64, scratch_operands = 9 : i64, tpu.core_type = #tpu.core_type<tc>, window_params = [{transform_indices = @transform_0, window_bounds = array<i64: 1, 64, 1>}, {}, {}, {}, {}, {}, {transform_indices = @transform_6, window_bounds = array<i64: 8, 128>}]} {
    %c0_i32 = arith.constant 0 : i32
    %0 = arith.cmpi eq, %arg1, %c0_i32 : i32
    %1 = arith.extui %0 : i1 to i32
    %c0_i32_0 = arith.constant 0 : i32
    %2 = arith.cmpi ne, %1, %c0_i32_0 : i32
    scf.if %2 {
      %c0_i32_15 = arith.constant 0 : i32
      %19 = tpu.memref_slice %arg17[%c0_i32_15] : memref<5x!tpu.dma_semaphore, #tpu.memory_space<semaphore_mem>> -> memref<1x!tpu.dma_semaphore, #tpu.memory_space<semaphore_mem>>
      %20 = tpu.memref_squeeze %19 : memref<1x!tpu.dma_semaphore, #tpu.memory_space<semaphore_mem>> -> memref<!tpu.dma_semaphore, #tpu.memory_space<semaphore_mem>>
      tpu.enqueue_dma source(%arg3 : memref<1x512xf32, #tpu.memory_space<any>>) target(%arg9 : memref<1x512xf32, #tpu.memory_space<vmem>>) target_semaphore(%20 : memref<!tpu.dma_semaphore, #tpu.memory_space<semaphore_mem>>)
      %c1_i32_16 = arith.constant 1 : i32
      %21 = tpu.memref_slice %arg17[%c1_i32_16] : memref<5x!tpu.dma_semaphore, #tpu.memory_space<semaphore_mem>> -> memref<1x!tpu.dma_semaphore, #tpu.memory_space<semaphore_mem>>
      %22 = tpu.memref_squeeze %21 : memref<1x!tpu.dma_semaphore, #tpu.memory_space<semaphore_mem>> -> memref<!tpu.dma_semaphore, #tpu.memory_space<semaphore_mem>>
      tpu.enqueue_dma source(%arg5 : memref<1x512xf32, #tpu.memory_space<any>>) target(%arg11 : memref<1x512xf32, #tpu.memory_space<vmem>>) target_semaphore(%22 : memref<!tpu.dma_semaphore, #tpu.memory_space<semaphore_mem>>)
      %c2_i32 = arith.constant 2 : i32
      %23 = tpu.memref_slice %arg17[%c2_i32] : memref<5x!tpu.dma_semaphore, #tpu.memory_space<semaphore_mem>> -> memref<1x!tpu.dma_semaphore, #tpu.memory_space<semaphore_mem>>
      %24 = tpu.memref_squeeze %23 : memref<1x!tpu.dma_semaphore, #tpu.memory_space<semaphore_mem>> -> memref<!tpu.dma_semaphore, #tpu.memory_space<semaphore_mem>>
      tpu.enqueue_dma source(%arg4 : memref<128x512xf32, #tpu.memory_space<any>>) target(%arg10 : memref<128x512xf32, #tpu.memory_space<vmem>>) target_semaphore(%24 : memref<!tpu.dma_semaphore, #tpu.memory_space<semaphore_mem>>)
      %c3_i32 = arith.constant 3 : i32
      %25 = tpu.memref_slice %arg17[%c3_i32] : memref<5x!tpu.dma_semaphore, #tpu.memory_space<semaphore_mem>> -> memref<1x!tpu.dma_semaphore, #tpu.memory_space<semaphore_mem>>
      %26 = tpu.memref_squeeze %25 : memref<1x!tpu.dma_semaphore, #tpu.memory_space<semaphore_mem>> -> memref<!tpu.dma_semaphore, #tpu.memory_space<semaphore_mem>>
      tpu.enqueue_dma source(%arg6 : memref<128x128xf32, #tpu.memory_space<any>>) target(%arg12 : memref<128x128xf32, #tpu.memory_space<vmem>>) target_semaphore(%26 : memref<!tpu.dma_semaphore, #tpu.memory_space<semaphore_mem>>)
      %c4_i32 = arith.constant 4 : i32
      %27 = tpu.memref_slice %arg17[%c4_i32] : memref<5x!tpu.dma_semaphore, #tpu.memory_space<semaphore_mem>> -> memref<1x!tpu.dma_semaphore, #tpu.memory_space<semaphore_mem>>
      %28 = tpu.memref_squeeze %27 : memref<1x!tpu.dma_semaphore, #tpu.memory_space<semaphore_mem>> -> memref<!tpu.dma_semaphore, #tpu.memory_space<semaphore_mem>>
      tpu.enqueue_dma source(%arg7 : memref<1x128xf32, #tpu.memory_space<any>>) target(%arg13 : memref<1x128xf32, #tpu.memory_space<vmem>>) target_semaphore(%28 : memref<!tpu.dma_semaphore, #tpu.memory_space<semaphore_mem>>)
      %cst_17 = arith.constant 0.000000e+00 : f32
      %29 = vector.broadcast %cst_17 : f32 to vector<8x128xf32>
      %c0_18 = arith.constant 0 : index
      %c0_19 = arith.constant 0 : index
      %30 = vector.load %arg15[%c0_18, %c0_19] : memref<8x128xf32, #tpu.memory_space<vmem>>, vector<8x128xf32>
      tpu.vector_store %arg15[%c0_18, %c0_19], %29 {strides = array<i32>} : memref<8x128xf32, #tpu.memory_space<vmem>>, vector<8x128xf32>,
      %cst_20 = arith.constant 0.000000e+00 : f32
      %31 = vector.broadcast %cst_20 : f32 to vector<8x128xf32>
      %c0_21 = arith.constant 0 : index
      %c0_22 = arith.constant 0 : index
      %32 = vector.load %arg16[%c0_21, %c0_22] : memref<8x128xf32, #tpu.memory_space<vmem>>, vector<8x128xf32>
      tpu.vector_store %arg16[%c0_21, %c0_22], %31 {strides = array<i32>} : memref<8x128xf32, #tpu.memory_space<vmem>>, vector<8x128xf32>,
    } else {
    }
    %3 = arith.extui %0 : i1 to i32
    %c0_i32_1 = arith.constant 0 : i32
    %4 = arith.cmpi ne, %3, %c0_i32_1 : i32
    scf.if %4 {
      %c0_i32_15 = arith.constant 0 : i32
      %19 = tpu.memref_slice %arg17[%c0_i32_15] : memref<5x!tpu.dma_semaphore, #tpu.memory_space<semaphore_mem>> -> memref<1x!tpu.dma_semaphore, #tpu.memory_space<semaphore_mem>>
      %20 = tpu.memref_squeeze %19 : memref<1x!tpu.dma_semaphore, #tpu.memory_space<semaphore_mem>> -> memref<!tpu.dma_semaphore, #tpu.memory_space<semaphore_mem>>
      tpu.wait_dma2 semaphore(%20 : memref<!tpu.dma_semaphore, #tpu.memory_space<semaphore_mem>>) src(%arg3 : memref<1x512xf32, #tpu.memory_space<any>>) dst(%arg9 : memref<1x512xf32, #tpu.memory_space<vmem>>)
      %c1_i32_16 = arith.constant 1 : i32
      %21 = tpu.memref_slice %arg17[%c1_i32_16] : memref<5x!tpu.dma_semaphore, #tpu.memory_space<semaphore_mem>> -> memref<1x!tpu.dma_semaphore, #tpu.memory_space<semaphore_mem>>
      %22 = tpu.memref_squeeze %21 : memref<1x!tpu.dma_semaphore, #tpu.memory_space<semaphore_mem>> -> memref<!tpu.dma_semaphore, #tpu.memory_space<semaphore_mem>>
      tpu.wait_dma2 semaphore(%22 : memref<!tpu.dma_semaphore, #tpu.memory_space<semaphore_mem>>) src(%arg5 : memref<1x512xf32, #tpu.memory_space<any>>) dst(%arg11 : memref<1x512xf32, #tpu.memory_space<vmem>>)
    } else {
    }
    %c0 = arith.constant 0 : index
    %c0_2 = arith.constant 0 : index
    %c0_3 = arith.constant 0 : index
    %5 = vector.load %arg2[%c0, %c0_2, %c0_3] : memref<1x64x1xf32, #tpu.memory_space<vmem>>, vector<1x64x1xf32>
    %6 = vector.shape_cast %5 : vector<1x64x1xf32> to vector<64x1xf32>
    %c0_4 = arith.constant 0 : index
    %c0_5 = arith.constant 0 : index
    %7 = vector.load %arg9[%c0_4, %c0_5] : memref<1x512xf32, #tpu.memory_space<vmem>>, vector<1x512xf32>
    %cst = arith.constant dense<0.000000e+00> : vector<64x512xf32>
    %8 = tpu.matmul %6, %7, %cst {dimension_numbers = #tpu.dot_dimension_numbers<[1], [0], [0], [1], [0, 0, 1, 1], [], []>} : vector<64x1xf32>, vector<1x512xf32>, vector<64x512xf32> -> vector<64x512xf32>
    %c0_6 = arith.constant 0 : index
    %c0_7 = arith.constant 0 : index
    %9 = vector.load %arg11[%c0_6, %c0_7] : memref<1x512xf32, #tpu.memory_space<vmem>>, vector<1x512xf32>
    %10 = vector.broadcast %9 : vector<1x512xf32> to vector<64x512xf32>
    %11 = arith.addf %8, %10 : vector<64x512xf32>
    %c0_8 = arith.constant 0 : index
    %c0_9 = arith.constant 0 : index
    %12 = vector.load %arg14[%c0_8, %c0_9] : memref<64x512xf32, #tpu.memory_space<vmem>>, vector<64x512xf32>
    tpu.vector_store %arg14[%c0_8, %c0_9], %11 {strides = array<i32>} : memref<64x512xf32, #tpu.memory_space<vmem>>, vector<64x512xf32>,
    %13 = arith.extui %0 : i1 to i32
    %c0_i32_10 = arith.constant 0 : i32
    %14 = arith.cmpi ne, %13, %c0_i32_10 : i32
    scf.if %14 {
      %c2_i32 = arith.constant 2 : i32
      %19 = tpu.memref_slice %arg17[%c2_i32] : memref<5x!tpu.dma_semaphore, #tpu.memory_space<semaphore_mem>> -> memref<1x!tpu.dma_semaphore, #tpu.memory_space<semaphore_mem>>
      %20 = tpu.memref_squeeze %19 : memref<1x!tpu.dma_semaphore, #tpu.memory_space<semaphore_mem>> -> memref<!tpu.dma_semaphore, #tpu.memory_space<semaphore_mem>>
      tpu.wait_dma2 semaphore(%20 : memref<!tpu.dma_semaphore, #tpu.memory_space<semaphore_mem>>) src(%arg4 : memref<128x512xf32, #tpu.memory_space<any>>) dst(%arg10 : memref<128x512xf32, #tpu.memory_space<vmem>>)
      %c3_i32 = arith.constant 3 : i32
      %21 = tpu.memref_slice %arg17[%c3_i32] : memref<5x!tpu.dma_semaphore, #tpu.memory_space<semaphore_mem>> -> memref<1x!tpu.dma_semaphore, #tpu.memory_space<semaphore_mem>>
      %22 = tpu.memref_squeeze %21 : memref<1x!tpu.dma_semaphore, #tpu.memory_space<semaphore_mem>> -> memref<!tpu.dma_semaphore, #tpu.memory_space<semaphore_mem>>
      tpu.wait_dma2 semaphore(%22 : memref<!tpu.dma_semaphore, #tpu.memory_space<semaphore_mem>>) src(%arg6 : memref<128x128xf32, #tpu.memory_space<any>>) dst(%arg12 : memref<128x128xf32, #tpu.memory_space<vmem>>)
      %c4_i32 = arith.constant 4 : i32
      %23 = tpu.memref_slice %arg17[%c4_i32] : memref<5x!tpu.dma_semaphore, #tpu.memory_space<semaphore_mem>> -> memref<1x!tpu.dma_semaphore, #tpu.memory_space<semaphore_mem>>
      %24 = tpu.memref_squeeze %23 : memref<1x!tpu.dma_semaphore, #tpu.memory_space<semaphore_mem>> -> memref<!tpu.dma_semaphore, #tpu.memory_space<semaphore_mem>>
      tpu.wait_dma2 semaphore(%24 : memref<!tpu.dma_semaphore, #tpu.memory_space<semaphore_mem>>) src(%arg7 : memref<1x128xf32, #tpu.memory_space<any>>) dst(%arg13 : memref<1x128xf32, #tpu.memory_space<vmem>>)
    } else {
    }
    %c0_i32_11 = arith.constant 0 : i32
    %c8_i32 = arith.constant 8 : i32
    %15 = arith.addi %c0_i32_11, %c8_i32 : i32
    %c1_i32 = arith.constant 1 : i32
    scf.for %arg18 = %c0_i32_11 to %15 step %c1_i32  : i32 {
      %c0_15 = arith.constant 0 : index
      %c0_16 = arith.constant 0 : index
      %19 = vector.load %arg15[%c0_15, %c0_16] : memref<8x128xf32, #tpu.memory_space<vmem>>, vector<8x128xf32>
      %c0_17 = arith.constant 0 : index
      %c0_18 = arith.constant 0 : index
      %20 = vector.load %arg16[%c0_17, %c0_18] : memref<8x128xf32, #tpu.memory_space<vmem>>, vector<8x128xf32>
      %c8_i32_19 = arith.constant 8 : i32
      %21 = arith.muli %arg18, %c8_i32_19 : i32
      %22 = tpu.assume_multiple %21, 8 : i32
      %23 = arith.index_cast %22 : i32 to index
      %c0_20 = arith.constant 0 : index
      %24 = vector.load %arg14[%23, %c0_20] : memref<64x512xf32, #tpu.memory_space<vmem>>, vector<8x512xf32>
      %c0_21 = arith.constant 0 : index
      %c0_22 = arith.constant 0 : index
      %25 = vector.load %arg10[%c0_21, %c0_22] : memref<128x512xf32, #tpu.memory_space<vmem>>, vector<128x512xf32>
      %cst_23 = arith.constant dense<0.000000e+00> : vector<8x512xf32>
      %26 = tpu.matmul %19, %25, %cst_23 {dimension_numbers = #tpu.dot_dimension_numbers<[1], [0], [0], [1], [0, 0, 1, 1], [], []>} : vector<8x128xf32>, vector<128x512xf32>, vector<8x512xf32> -> vector<8x512xf32>
      %27 = arith.addf %24, %26 : vector<8x512xf32>
      %28 = vector.extract_strided_slice %27 {offsets = [0, 0], sizes = [8, 128], strides = [1, 1]} : vector<8x512xf32> to vector<8x128xf32>
      %cst_24 = arith.constant 5.000000e-01 : f32
      %29 = vector.broadcast %cst_24 : f32 to vector<8x128xf32>
      %30 = arith.mulf %29, %28 : vector<8x128xf32>
      %31 = math.tanh %30 : vector<8x128xf32>
      %cst_25 = arith.constant 1.000000e+00 : f32
      %32 = vector.broadcast %cst_25 : f32 to vector<8x128xf32>
      %33 = arith.addf %31, %32 : vector<8x128xf32>
      %cst_26 = arith.constant 5.000000e-01 : f32
      %34 = vector.broadcast %cst_26 : f32 to vector<8x128xf32>
      %35 = arith.mulf %34, %33 : vector<8x128xf32>
      %36 = vector.extract_strided_slice %27 {offsets = [0, 128], sizes = [8, 128], strides = [1, 1]} : vector<8x512xf32> to vector<8x128xf32>
      %cst_27 = arith.constant 5.000000e-01 : f32
      %37 = vector.broadcast %cst_27 : f32 to vector<8x128xf32>
      %38 = arith.mulf %37, %36 : vector<8x128xf32>
      %39 = math.tanh %38 : vector<8x128xf32>
      %cst_28 = arith.constant 1.000000e+00 : f32
      %40 = vector.broadcast %cst_28 : f32 to vector<8x128xf32>
      %41 = arith.addf %39, %40 : vector<8x128xf32>
      %cst_29 = arith.constant 5.000000e-01 : f32
      %42 = vector.broadcast %cst_29 : f32 to vector<8x128xf32>
      %43 = arith.mulf %42, %41 : vector<8x128xf32>
      %44 = vector.extract_strided_slice %27 {offsets = [0, 256], sizes = [8, 128], strides = [1, 1]} : vector<8x512xf32> to vector<8x128xf32>
      %45 = math.tanh %44 : vector<8x128xf32>
      %46 = vector.extract_strided_slice %27 {offsets = [0, 384], sizes = [8, 128], strides = [1, 1]} : vector<8x512xf32> to vector<8x128xf32>
      %cst_30 = arith.constant 5.000000e-01 : f32
      %47 = vector.broadcast %cst_30 : f32 to vector<8x128xf32>
      %48 = arith.mulf %47, %46 : vector<8x128xf32>
      %49 = math.tanh %48 : vector<8x128xf32>
      %cst_31 = arith.constant 1.000000e+00 : f32
      %50 = vector.broadcast %cst_31 : f32 to vector<8x128xf32>
      %51 = arith.addf %49, %50 : vector<8x128xf32>
      %cst_32 = arith.constant 5.000000e-01 : f32
      %52 = vector.broadcast %cst_32 : f32 to vector<8x128xf32>
      %53 = arith.mulf %52, %51 : vector<8x128xf32>
      %54 = arith.mulf %43, %20 : vector<8x128xf32>
      %55 = arith.mulf %35, %45 : vector<8x128xf32>
      %56 = arith.addf %54, %55 : vector<8x128xf32>
      %57 = math.tanh %56 : vector<8x128xf32>
      %58 = arith.mulf %53, %57 : vector<8x128xf32>
      %c0_33 = arith.constant 0 : index
      %c0_34 = arith.constant 0 : index
      %59 = vector.load %arg16[%c0_33, %c0_34] : memref<8x128xf32, #tpu.memory_space<vmem>>, vector<8x128xf32>
      tpu.vector_store %arg16[%c0_33, %c0_34], %56 {strides = array<i32>} : memref<8x128xf32, #tpu.memory_space<vmem>>, vector<8x128xf32>,
      %c0_35 = arith.constant 0 : index
      %c0_36 = arith.constant 0 : index
      %60 = vector.load %arg15[%c0_35, %c0_36] : memref<8x128xf32, #tpu.memory_space<vmem>>, vector<8x128xf32>
      tpu.vector_store %arg15[%c0_35, %c0_36], %58 {strides = array<i32>} : memref<8x128xf32, #tpu.memory_space<vmem>>, vector<8x128xf32>,
    }
    %c8_i32_12 = arith.constant 8 : i32
    %c0_i32_13 = arith.constant 0 : i32
    %16 = arith.cmpi eq, %arg1, %c0_i32_13 : i32
    %17 = arith.extui %16 : i1 to i32
    %c0_i32_14 = arith.constant 0 : i32
    %18 = arith.cmpi ne, %17, %c0_i32_14 : i32
    scf.if %18 {
      %c0_15 = arith.constant 0 : index
      %c0_16 = arith.constant 0 : index
      %19 = vector.load %arg15[%c0_15, %c0_16] : memref<8x128xf32, #tpu.memory_space<vmem>>, vector<8x128xf32>
      %c0_17 = arith.constant 0 : index
      %c0_18 = arith.constant 0 : index
      %20 = vector.load %arg12[%c0_17, %c0_18] : memref<128x128xf32, #tpu.memory_space<vmem>>, vector<128x128xf32>
      %cst_19 = arith.constant dense<0.000000e+00> : vector<8x128xf32>
      %21 = tpu.matmul %19, %20, %cst_19 {dimension_numbers = #tpu.dot_dimension_numbers<[1], [0], [0], [1], [0, 0, 1, 1], [], []>} : vector<8x128xf32>, vector<128x128xf32>, vector<8x128xf32> -> vector<8x128xf32>
      %c0_20 = arith.constant 0 : index
      %c0_21 = arith.constant 0 : index
      %22 = vector.load %arg13[%c0_20, %c0_21] : memref<1x128xf32, #tpu.memory_space<vmem>>, vector<1x128xf32>
      %23 = vector.broadcast %22 : vector<1x128xf32> to vector<8x128xf32>
      %24 = arith.addf %21, %23 : vector<8x128xf32>
      %c0_22 = arith.constant 0 : index
      %c0_23 = arith.constant 0 : index
      %25 = vector.load %arg8[%c0_22, %c0_23] : memref<8x128xf32, #tpu.memory_space<vmem>>, vector<8x128xf32>
      tpu.vector_store %arg8[%c0_22, %c0_23], %24 {strides = array<i32>} : memref<8x128xf32, #tpu.memory_space<vmem>>, vector<8x128xf32>,
    } else {
    }
    return
  }
  func.func @transform_0(%arg0: i32, %arg1: i32) -> (i32, i32, i32) {
    %c0_i32 = arith.constant 0 : i32
    %c0_i32_0 = arith.constant 0 : i32
    return %arg0, %arg1, %c0_i32 : i32, i32, i32
  }
  func.func @transform_6(%arg0: i32, %arg1: i32) -> (i32, i32) {
    %c0_i32 = arith.constant 0 : i32
    %c0_i32_0 = arith.constant 0 : i32
    return %arg0, %c0_i32 : i32, i32
  }
}

</mosaic_0001>

<llo_original>
// kernel: tpu_custom_call.1
$region0: #{tpu_custom_call.1}
  #allocation0 [shape = 'u32[]', space=smem, size = 0x4, offset = 0x4, fixed_abs, tag = 'smem constant byte address 0x4 - core index']
  #allocation1 [shape = 'u32[144,128]{1,0:T(1,128)}', space=vmem, size = 0x12000, scoped, tag = 'internal scratch']
  #allocation2 [shape = 'f32[1,512]{1,0:T(1,128)}', space=vmem, size = 0x800, scoped, tag = 'scratch operand']
  #allocation3 [shape = 'f32[128,512]{1,0:T(8,128)}', space=vmem, size = 0x40000, scoped, tag = 'scratch operand']
  #allocation4 [shape = 'f32[1,512]{1,0:T(1,128)}', space=vmem, size = 0x800, scoped, tag = 'scratch operand']
  #allocation5 [shape = 'f32[128,128]{1,0:T(8,128)}', space=vmem, size = 0x10000, scoped, tag = 'scratch operand']
  #allocation6 [shape = 'f32[1,128]{1,0:T(1,128)}', space=vmem, size = 0x200, scoped, tag = 'scratch operand']
  #allocation7 [shape = 'f32[64,512]{1,0:T(8,128)}', space=vmem, size = 0x20000, scoped, tag = 'scratch operand']
  #allocation8 [shape = 'f32[8,128]{1,0:T(8,128)}', space=vmem, size = 0x1000, scoped, tag = 'scratch operand']
  #allocation9 [shape = 'f32[8,128]{1,0:T(8,128)}', space=vmem, size = 0x1000, scoped, tag = 'scratch operand']
  #allocation10 [shape = 's32[5]{0}', space=sflag, size = 0x14, scoped, tag = 'scratch operand']
  #allocation13 [shape = 's32[]', space=sflag, size = 0x4, offset = 0, fixed_abs, tag = 'sflag constant byte address 0x0 - dummy sync flag']
  #allocation14 [shape = 's32[]', space=sflag, size = 0x4, offset = 0, fixed_abs, tag = 'sflag constant byte address 0x0 - dummy sync flag']
  #allocation15 [shape = 's32[]', space=sflag, size = 0x4, offset = 0, fixed_abs, tag = 'sflag constant byte address 0x0 - dummy sync flag']
  #allocation16 [shape = 's32[]', space=sflag, size = 0x4, offset = 0, fixed_abs, tag = 'sflag constant byte address 0x0 - dummy sync flag']
  #allocation17 [shape = 'u32[]', space=smem, size = 0x4, offset = 0x44, fixed_abs, tag = 'smem constant byte address 0x44 - assertion arg 0']
  #allocation18 [shape = 'u32[]', space=smem, size = 0x4, offset = 0x48, fixed_abs, tag = 'smem constant byte address 0x48 - assertion arg 1']
  #allocation19 [shape = 's32[]', space=sflag, size = 0x4, offset = 0, fixed_abs, tag = 'sflag constant byte address 0x0 - dummy sync flag']
  #allocation20 [shape = 's32[]', space=sflag, size = 0x4, offset = 0, fixed_abs, tag = 'sflag constant byte address 0x0 - dummy sync flag']
  #allocation21 [shape = 's32[]', space=sflag, size = 0x4, offset = 0, fixed_abs, tag = 'sflag constant byte address 0x0 - dummy sync flag']
  %s0 = inlined_call_operand.vmem [shape: f32[1,64,1], index: 0, kind: input, shape index: {}]
  %s1 = inlined_call_operand.vmem [shape: f32[1,512], index: 1, kind: input, shape index: {}]
  %s2 = inlined_call_operand.hbm [shape: f32[128,512], index: 2, kind: input, shape index: {}]
  %s3 = inlined_call_operand.vmem [shape: f32[1,512], index: 3, kind: input, shape index: {}]
  %s4 = inlined_call_operand.hbm [shape: f32[128,128], index: 4, kind: input, shape index: {}]
  %s5 = inlined_call_operand.vmem [shape: f32[1,128], index: 5, kind: input, shape index: {}]
  %s6 = inlined_call_operand.hbm [shape: f32[8,128], index: 6, kind: output, shape index: {}]
  %s7 = sld [smem:[#allocation0]]
  $region131: #{tpu_custom_call.1} parent=0
    _
  %s9 = ssub.s32 1, %s7
  %s10 = scalar_select 0, %s9, %s7
  $region1: #{tpu_custom_call.1} parent=0
    #allocation11 [shape = 'u8[4096]{0}', space=vmem, size = 0x1000, scoped, tag = 'output window, operand 0, single buffered']
    #allocation12 [shape = 's32[1]{0}', space=sflag, size = 0x4, scoped, tag = 'scoped memory for tpu_custom_call.1']
    %11 = vsyncpa [#allocation12], 0
    // Predicated region
    $region2: #{tpu_custom_call.1} parent=1 // pred_check
      _
    $region3: #{tpu_custom_call.1} parent=1 // pred_check_branch
      %13 = sbr.rel (0) target = $region5
    $region4: #{tpu_custom_call.1} parent=1 // pred_region
      _
    $region5: #{tpu_custom_call.1} parent=1 // pred_fallthru
      _
    %p14 = scmp.eq.s32.totalorder 0, 0
    // Predicated region
    $region6: #{tpu_custom_call.1} parent=1 // pred_check
      %p15 = pneg %p14
    $region7: #{tpu_custom_call.1} parent=1 // pred_check_branch
      %17 = sbr.rel (%p15) target = $region9
    $region8: #{tpu_custom_call.1} parent=1 // pred_region
      %p19 = scmp.lt.u32.totalorder 4, 8
      %p20 = pneg %p19
      // Predicated region
      $region10: #{tpu_custom_call.1} parent=8 // pred_check
        _
      $region11: #{tpu_custom_call.1} parent=8 // pred_check_branch
        %22 = sbr.rel (%p19) target = $region13
      $region12: #{tpu_custom_call.1} parent=8 // pred_region
        %s37 = sand.u32 4, 7
        %p38 = scmp.eq.s32.totalorder %s37, 0
        %p39 = pneg %p38
        // Predicated region
        $region25: #{tpu_custom_call.1} parent=12 // pred_check
          _
        $region26: #{tpu_custom_call.1} parent=12 // pred_check_branch
          %41 = sbr.rel (%p38) target = $region28
        $region27: #{tpu_custom_call.1} parent=12 // pred_region
          %s42 = sand.u32 4, 7
          %s43 = ssub.s32 4, %s42
          %s44 = scalar_lea.vmem %s1, %s43
          %s45 = ssub.s32 4, %s42
          %s46 = scalar_lea.vmem [#allocation2], %s45
          %s47 = sshllo.u32 0, %s42
          loop: start=0, step=1, limit=1
          $region29: #{tpu_custom_call.1} parent=27 // loop_pre_header
            _
          $region30: #{tpu_custom_call.1} parent=27 // loop_header
            %s49 = sphi 0, %s53
            %p50 = scmp.ge.s32.totalorder %s49, 1
            %s54 = sphi %s44, %s44
            %s55 = sphi %s46, %s46
          $region31: #{tpu_custom_call.1} parent=27 // loop_header_branch
            %52 = sbr.rel (%p50) target = $region35
          $region32: #{tpu_custom_call.1} parent=27 // loop_body
            %v56 = vld [vmem:[%s54] sm:%s47]
            %57 = vst [vmem:[%s55] sm:%s47] %v56
          $region33: #{tpu_custom_call.1} parent=27 // loop_footer
            %s53 = sadd.s32 1, %s49
          $region34: #{tpu_custom_call.1} parent=27 // loop_footer_branch
            %48 = sbr.rel target = $region30
          $region35: #{tpu_custom_call.1} parent=27 // loop_exit
            _
        $region28: #{tpu_custom_call.1} parent=12 // pred_fallthru
          _
      $region13: #{tpu_custom_call.1} parent=8 // pred_fallthru
        _
      // Predicated region
      $region14: #{tpu_custom_call.1} parent=8 // pred_check
        %p23 = pneg %p19
      $region15: #{tpu_custom_call.1} parent=8 // pred_check_branch
        %25 = sbr.rel (%p23) target = $region17
      $region16: #{tpu_custom_call.1} parent=8 // pred_region
        %s26 = sshllo.u32 0, 4
        loop: start=0, step=1, limit=1
        $region18: #{tpu_custom_call.1} parent=16 // loop_pre_header
          _
        $region19: #{tpu_custom_call.1} parent=16 // loop_header
          %s28 = sphi 0, %s32
          %p29 = scmp.ge.s32.totalorder %s28, 1
          %s33 = sphi %s1, %s1
          %s34 = sphi [#allocation2], [#allocation2]
        $region20: #{tpu_custom_call.1} parent=16 // loop_header_branch
          %31 = sbr.rel (%p29) target = $region24
        $region21: #{tpu_custom_call.1} parent=16 // loop_body
          %v35 = vld [vmem:[%s33] sm:%s26]
          %36 = vst [vmem:[%s34] sm:%s26] %v35
        $region22: #{tpu_custom_call.1} parent=16 // loop_footer
          %s32 = sadd.s32 1, %s28
        $region23: #{tpu_custom_call.1} parent=16 // loop_footer_branch
          %27 = sbr.rel target = $region19
        $region24: #{tpu_custom_call.1} parent=16 // loop_exit
          _
      $region17: #{tpu_custom_call.1} parent=8 // pred_fallthru
        _
      // Predicated region
      $region36: #{tpu_custom_call.1} parent=8 // pred_check
        _
      $region37: #{tpu_custom_call.1} parent=8 // pred_check_branch
        %60 = sbr.rel (0) target = $region39
      $region38: #{tpu_custom_call.1} parent=8 // pred_region
        %61 = vsyncadd [#allocation10], 64
      $region39: #{tpu_custom_call.1} parent=8 // pred_fallthru
        _
      %s62 = scalar_lea.sflag [#allocation10], 1
      %p64 = scmp.lt.u32.totalorder 4, 8
      %p65 = pneg %p64
      // Predicated region
      $region40: #{tpu_custom_call.1} parent=8 // pred_check
        _
      $region41: #{tpu_custom_call.1} parent=8 // pred_check_branch
        %67 = sbr.rel (%p64) target = $region43
      $region42: #{tpu_custom_call.1} parent=8 // pred_region
        %s82 = sand.u32 4, 7
        %p83 = scmp.eq.s32.totalorder %s82, 0
        %p84 = pneg %p83
        // Predicated region
        $region55: #{tpu_custom_call.1} parent=42 // pred_check
          _
        $region56: #{tpu_custom_call.1} parent=42 // pred_check_branch
          %86 = sbr.rel (%p83) target = $region58
        $region57: #{tpu_custom_call.1} parent=42 // pred_region
          %s87 = sand.u32 4, 7
          %s88 = ssub.s32 4, %s87
          %s89 = scalar_lea.vmem %s3, %s88
          %s90 = ssub.s32 4, %s87
          %s91 = scalar_lea.vmem [#allocation4], %s90
          %s92 = sshllo.u32 0, %s87
          loop: start=0, step=1, limit=1
          $region59: #{tpu_custom_call.1} parent=57 // loop_pre_header
            _
          $region60: #{tpu_custom_call.1} parent=57 // loop_header
            %s94 = sphi 0, %s98
            %p95 = scmp.ge.s32.totalorder %s94, 1
            %s99 = sphi %s89, %s89
            %s100 = sphi %s91, %s91
          $region61: #{tpu_custom_call.1} parent=57 // loop_header_branch
            %97 = sbr.rel (%p95) target = $region65
          $region62: #{tpu_custom_call.1} parent=57 // loop_body
            %v101 = vld [vmem:[%s99] sm:%s92]
            %102 = vst [vmem:[%s100] sm:%s92] %v101
          $region63: #{tpu_custom_call.1} parent=57 // loop_footer
            %s98 = sadd.s32 1, %s94
          $region64: #{tpu_custom_call.1} parent=57 // loop_footer_branch
            %93 = sbr.rel target = $region60
          $region65: #{tpu_custom_call.1} parent=57 // loop_exit
            _
        $region58: #{tpu_custom_call.1} parent=42 // pred_fallthru
          _
      $region43: #{tpu_custom_call.1} parent=8 // pred_fallthru
        _
      // Predicated region
      $region44: #{tpu_custom_call.1} parent=8 // pred_check
        %p68 = pneg %p64
      $region45: #{tpu_custom_call.1} parent=8 // pred_check_branch
        %70 = sbr.rel (%p68) target = $region47
      $region46: #{tpu_custom_call.1} parent=8 // pred_region
        %s71 = sshllo.u32 0, 4
        loop: start=0, step=1, limit=1
        $region48: #{tpu_custom_call.1} parent=46 // loop_pre_header
          _
        $region49: #{tpu_custom_call.1} parent=46 // loop_header
          %s73 = sphi 0, %s77
          %p74 = scmp.ge.s32.totalorder %s73, 1
          %s78 = sphi %s3, %s3
          %s79 = sphi [#allocation4], [#allocation4]
        $region50: #{tpu_custom_call.1} parent=46 // loop_header_branch
          %76 = sbr.rel (%p74) target = $region54
        $region51: #{tpu_custom_call.1} parent=46 // loop_body
          %v80 = vld [vmem:[%s78] sm:%s71]
          %81 = vst [vmem:[%s79] sm:%s71] %v80
        $region52: #{tpu_custom_call.1} parent=46 // loop_footer
          %s77 = sadd.s32 1, %s73
        $region53: #{tpu_custom_call.1} parent=46 // loop_footer_branch
          %72 = sbr.rel target = $region49
        $region54: #{tpu_custom_call.1} parent=46 // loop_exit
          _
      $region47: #{tpu_custom_call.1} parent=8 // pred_fallthru
        _
      // Predicated region
      $region66: #{tpu_custom_call.1} parent=8 // pred_check
        _
      $region67: #{tpu_custom_call.1} parent=8 // pred_check_branch
        %105 = sbr.rel (0) target = $region69
      $region68: #{tpu_custom_call.1} parent=8 // pred_region
        %106 = vsyncadd %s62, 64
      $region69: #{tpu_custom_call.1} parent=8 // pred_fallthru
        _
      %s107 = scalar_lea.sflag [#allocation10], 2
      // Predicated region
      $region70: #{tpu_custom_call.1} parent=8 // pred_check
        _
      $region71: #{tpu_custom_call.1} parent=8 // pred_check_branch
        %109 = sbr.rel target = $region73
      $region72: #{tpu_custom_call.1} parent=8 // pred_region
        %110 = sst [smem:[#allocation17]] [#allocation16]
        %111 = sst [smem:[#allocation18]] [#allocation15]
      $region73: #{tpu_custom_call.1} parent=8 // pred_fallthru
        _
      %113 = shalt.err (0)
      %s115 = sshll.u32 [#allocation3], 4
      %s116 = int_to_ptr.vmem [resolvable:$true] %s115
      %118 = dma.hbm_to_vmem [thread:$0]  %s2, 8192, %s116, %s107
      %s119 = scalar_lea.sflag [#allocation10], 3
      // Predicated region
      $region74: #{tpu_custom_call.1} parent=8 // pred_check
        _
      $region75: #{tpu_custom_call.1} parent=8 // pred_check_branch
        %121 = sbr.rel target = $region77
      $region76: #{tpu_custom_call.1} parent=8 // pred_region
        %122 = sst [smem:[#allocation17]] [#allocation20]
        %123 = sst [smem:[#allocation18]] [#allocation19]
      $region77: #{tpu_custom_call.1} parent=8 // pred_fallthru
        _
      %125 = shalt.err (0)
      %s127 = sshll.u32 [#allocation5], 4
      %s128 = int_to_ptr.vmem [resolvable:$true] %s127
      %130 = dma.hbm_to_vmem [thread:$0]  %s4, 2048, %s128, %s119
      %s131 = scalar_lea.sflag [#allocation10], 4
      %p133 = scmp.lt.u32.totalorder 1, 8
      %p134 = pneg %p133
      // Predicated region
      $region78: #{tpu_custom_call.1} parent=8 // pred_check
        _
      $region79: #{tpu_custom_call.1} parent=8 // pred_check_branch
        %136 = sbr.rel (%p133) target = $region81
      $region80: #{tpu_custom_call.1} parent=8 // pred_region
        %s151 = sand.u32 1, 7
        %p152 = scmp.eq.s32.totalorder %s151, 0
        %p153 = pneg %p152
        // Predicated region
        $region93: #{tpu_custom_call.1} parent=80 // pred_check
          _
        $region94: #{tpu_custom_call.1} parent=80 // pred_check_branch
          %155 = sbr.rel (%p152) target = $region96
        $region95: #{tpu_custom_call.1} parent=80 // pred_region
          %s156 = sand.u32 1, 7
          %s157 = ssub.s32 1, %s156
          %s158 = scalar_lea.vmem %s5, %s157
          %s159 = ssub.s32 1, %s156
          %s160 = scalar_lea.vmem [#allocation6], %s159
          %s161 = sshllo.u32 0, %s156
          loop: start=0, step=1, limit=1
          $region97: #{tpu_custom_call.1} parent=95 // loop_pre_header
            _
          $region98: #{tpu_custom_call.1} parent=95 // loop_header
            %s163 = sphi 0, %s167
            %p164 = scmp.ge.s32.totalorder %s163, 1
            %s168 = sphi %s158, %s158
            %s169 = sphi %s160, %s160
          $region99: #{tpu_custom_call.1} parent=95 // loop_header_branch
            %166 = sbr.rel (%p164) target = $region103
          $region100: #{tpu_custom_call.1} parent=95 // loop_body
            %v170 = vld [vmem:[%s168] sm:%s161]
            %171 = vst [vmem:[%s169] sm:%s161] %v170
          $region101: #{tpu_custom_call.1} parent=95 // loop_footer
            %s167 = sadd.s32 1, %s163
          $region102: #{tpu_custom_call.1} parent=95 // loop_footer_branch
            %162 = sbr.rel target = $region98
          $region103: #{tpu_custom_call.1} parent=95 // loop_exit
            _
        $region96: #{tpu_custom_call.1} parent=80 // pred_fallthru
          _
      $region81: #{tpu_custom_call.1} parent=8 // pred_fallthru
        _
      // Predicated region
      $region82: #{tpu_custom_call.1} parent=8 // pred_check
        %p137 = pneg %p133
      $region83: #{tpu_custom_call.1} parent=8 // pred_check_branch
        %139 = sbr.rel (%p137) target = $region85
      $region84: #{tpu_custom_call.1} parent=8 // pred_region
        %s140 = sshllo.u32 0, 1
        loop: start=0, step=1, limit=1
        $region86: #{tpu_custom_call.1} parent=84 // loop_pre_header
          _
        $region87: #{tpu_custom_call.1} parent=84 // loop_header
          %s142 = sphi 0, %s146
          %p143 = scmp.ge.s32.totalorder %s142, 1
          %s147 = sphi %s5, %s5
          %s148 = sphi [#allocation6], [#allocation6]
        $region88: #{tpu_custom_call.1} parent=84 // loop_header_branch
          %145 = sbr.rel (%p143) target = $region92
        $region89: #{tpu_custom_call.1} parent=84 // loop_body
          %v149 = vld [vmem:[%s147] sm:%s140]
          %150 = vst [vmem:[%s148] sm:%s140] %v149
        $region90: #{tpu_custom_call.1} parent=84 // loop_footer
          %s146 = sadd.s32 1, %s142
        $region91: #{tpu_custom_call.1} parent=84 // loop_footer_branch
          %141 = sbr.rel target = $region87
        $region92: #{tpu_custom_call.1} parent=84 // loop_exit
          _
      $region85: #{tpu_custom_call.1} parent=8 // pred_fallthru
        _
      // Predicated region
      $region104: #{tpu_custom_call.1} parent=8 // pred_check
        _
      $region105: #{tpu_custom_call.1} parent=8 // pred_check_branch
        %174 = sbr.rel (0) target = $region107
      $region106: #{tpu_custom_call.1} parent=8 // pred_region
        %175 = vsyncadd %s131, 16
      $region107: #{tpu_custom_call.1} parent=8 // pred_fallthru
        _
      %176 = vst [vmem:[#allocation8] sm:$0xff] 0.0
      %177 = vst [vmem:[#allocation9] sm:$0xff] 0.0
      %s178 = smul.u32 1, 4
      %s179 = sshll.u32 %s178, 4
      %180 = dma.done [#allocation10], %s179
      %s181 = sshll.u32 %s178, 4
      %182 = dma.done %s62, %s181
    $region9: #{tpu_custom_call.1} parent=1 // pred_fallthru
      _
    %v183 = vld [vmem:[%s0] sm:$0xff]
    %v184 = vld [vmem:[%s0 + $0x8] sm:$0xff]
    %v185 = vld [vmem:[%s0 + $0x10] sm:$0xff]
    %v186 = vld [vmem:[%s0 + $0x18] sm:$0xff]
    %v187 = vld [vmem:[%s0 + $0x20] sm:$0xff]
    %v188 = vld [vmem:[%s0 + $0x28] sm:$0xff]
    %v189 = vld [vmem:[%s0 + $0x30] sm:$0xff]
    %v190 = vld [vmem:[%s0 + $0x38] sm:$0xff]
    %v191 = vld [vmem:[#allocation2] sm:$0xf]
    %v192 = vld [vmem:[#allocation4] sm:$0xf]
    %v194 = vlaneseq
    %v195 = vshrl.u32 %v194, 7
    %v196 = vsub.s32 0, %v195
    %v197 = vrot.slane %v192, %v196
    %v198 = vlaneseq
    %v199 = vshrl.u32 %v198, 7
    %v200 = vsub.s32 1, %v199
    %v201 = vrot.slane %v192, %v200
    %v202 = vlaneseq
    %v203 = vshrl.u32 %v202, 7
    %v204 = vsub.s32 2, %v203
    %v205 = vrot.slane %v192, %v204
    %v206 = vlaneseq
    %v207 = vshrl.u32 %v206, 7
    %v208 = vsub.s32 3, %v207
    %v209 = vrot.slane %v192, %v208
    %v215 = vlaneseq
    %v216 = vshrl.u32 %v215, 7
    %v217 = vsub.s32 0, %v216
    %v218 = vrot.slane %v191, %v217
    %v219 = vlaneseq
    %v220 = vshrl.u32 %v219, 7
    %v221 = vsub.s32 1, %v220
    %v222 = vrot.slane %v191, %v221
    %v223 = vlaneseq
    %v224 = vshrl.u32 %v223, 7
    %v225 = vsub.s32 2, %v224
    %v226 = vrot.slane %v191, %v225
    %v227 = vlaneseq
    %v228 = vshrl.u32 %v227, 7
    %v229 = vsub.s32 3, %v228
    %v230 = vrot.slane %v191, %v229
    %vm231 = vcmask 7168
    %v233 = vsel %vm231, %v183, 0
    %v236 = vsel %vm231, %v184, 0
    %v239 = vsel %vm231, %v185, 0
    %v242 = vsel %vm231, %v186, 0
    %v245 = vsel %vm231, %v187, 0
    %v248 = vsel %vm231, %v188, 0
    %v251 = vsel %vm231, %v189, 0
    %v254 = vsel %vm231, %v190, 0
    %vm256 = vcmask 1040384
    %v257 = vsel %vm256, %v218, 0
    %v259 = vsel %vm256, %v222, 0
    %v261 = vsel %vm256, %v226, 0
    %v263 = vsel %vm256, %v230, 0
    %265 = vmatprep.subr.mxu0 %v259
    %266 = vmatpush1.msra.mxu0 %v257
    %267 = vmatprep.subr.mxu0 0.0
    %268 = vmatpush1.msra.mxu0 0.0
    %269 = vmatprep.subr.mxu0 0.0
    %270 = vmatpush1.msra.mxu0 0.0
    %271 = vmatprep.subr.mxu0 0.0
    %272 = vmatpush1.msra.mxu0 0.0
    %273 = vmatprep.subr.mxu0 0.0
    %274 = vmatpush1.msra.mxu0 0.0
    %275 = vmatprep.subr.mxu0 0.0
    %276 = vmatpush1.msra.mxu0 0.0
    %277 = vmatprep.subr.mxu0 0.0
    %278 = vmatpush1.msra.mxu0 0.0
    %279 = vmatprep.subr.mxu0 0.0
    %280 = vmatpush1.msra.mxu0 0.0
    %281 = vmatprep.subr.mxu0 0.0
    %282 = vmatpush1.msra.mxu0 0.0
    %283 = vmatprep.subr.mxu0 0.0
    %284 = vmatpush1.msra.mxu0 0.0
    %285 = vmatprep.subr.mxu0 0.0
    %286 = vmatpush1.msra.mxu0 0.0
    %287 = vmatprep.subr.mxu0 0.0
    %288 = vmatpush1.msra.mxu0 0.0
    %289 = vmatprep.subr.mxu0 0.0
    %290 = vmatpush1.msra.mxu0 0.0
    %291 = vmatprep.subr.mxu0 0.0
    %292 = vmatpush1.msra.mxu0 0.0
    %293 = vmatprep.subr.mxu0 0.0
    %294 = vmatpush1.msra.mxu0 0.0
    %295 = vmatprep.subr.mxu0 0.0
    %296 = vmatpush1.msra.mxu0 0.0
    %297 = vmatprep.subr.mxu0 0.0
    %298 = vmatpush1.msra.mxu0 0.0
    %299 = vmatprep.subr.mxu0 0.0
    %300 = vmatpush1.msra.mxu0 0.0
    %301 = vmatprep.subr.mxu0 0.0
    %302 = vmatpush1.msra.mxu0 0.0
    %303 = vmatprep.subr.mxu0 0.0
    %304 = vmatpush1.msra.mxu0 0.0
    %305 = vmatprep.subr.mxu0 0.0
    %306 = vmatpush1.msra.mxu0 0.0
    %307 = vmatprep.subr.mxu0 0.0
    %308 = vmatpush1.msra.mxu0 0.0
    %309 = vmatprep.subr.mxu0 0.0
    %310 = vmatpush1.msra.mxu0 0.0
    %311 = vmatprep.subr.mxu0 0.0
    %312 = vmatpush1.msra.mxu0 0.0
    %313 = vmatprep.subr.mxu0 0.0
    %314 = vmatpush1.msra.mxu0 0.0
    %315 = vmatprep.subr.mxu0 0.0
    %316 = vmatpush1.msra.mxu0 0.0
    %317 = vmatprep.subr.mxu0 0.0
    %318 = vmatpush1.msra.mxu0 0.0
    %319 = vmatprep.subr.mxu0 0.0
    %320 = vmatpush1.msra.mxu0 0.0
    %321 = vmatprep.subr.mxu0 0.0
    %322 = vmatpush1.msra.mxu0 0.0
    %323 = vmatprep.subr.mxu0 0.0
    %324 = vmatpush1.msra.mxu0 0.0
    %325 = vmatprep.subr.mxu0 0.0
    %326 = vmatpush1.msra.mxu0 0.0
    %327 = vmatprep.subr.mxu0 0.0
    %328 = vmatpush1.msra.mxu0 0.0
    %329 = vmatprep.mubr.f32.mxu0 0.0
    %330 = vmatmul.mubr.f32.gmra.mrb[0].mxu0 %v233
    %v331 = vpop.f32.mrb[0].mxu0
    %v332 = vadd.f32 %v197, %v331
    %v333 = vpop.f32.mrb[0].mxu0
    %v334 = vadd.f32 %v201, %v333
    %335 = vmatprep.mubr.f32.mxu0 0.0
    %336 = vmatmul.mubr.f32.gmra.mrb[0].mxu0 %v236
    %v337 = vpop.f32.mrb[0].mxu0
    %v338 = vadd.f32 %v197, %v337
    %v339 = vpop.f32.mrb[0].mxu0
    %v340 = vadd.f32 %v201, %v339
    %341 = vmatprep.mubr.f32.mxu0 0.0
    %342 = vmatmul.mubr.f32.gmra.mrb[0].mxu0 %v239
    %v343 = vpop.f32.mrb[0].mxu0
    %v344 = vadd.f32 %v197, %v343
    %v345 = vpop.f32.mrb[0].mxu0
    %v346 = vadd.f32 %v201, %v345
    %347 = vmatprep.mubr.f32.mxu0 0.0
    %348 = vmatmul.mubr.f32.gmra.mrb[0].mxu0 %v242
    %v349 = vpop.f32.mrb[0].mxu0
    %v350 = vadd.f32 %v197, %v349
    %v351 = vpop.f32.mrb[0].mxu0
    %v352 = vadd.f32 %v201, %v351
    %353 = vmatprep.mubr.f32.mxu0 0.0
    %354 = vmatmul.mubr.f32.gmra.mrb[0].mxu0 %v245
    %v355 = vpop.f32.mrb[0].mxu0
    %v356 = vadd.f32 %v197, %v355
    %v357 = vpop.f32.mrb[0].mxu0
    %v358 = vadd.f32 %v201, %v357
    %359 = vmatprep.mubr.f32.mxu0 0.0
    %360 = vmatmul.mubr.f32.gmra.mrb[0].mxu0 %v248
    %v361 = vpop.f32.mrb[0].mxu0
    %v362 = vadd.f32 %v197, %v361
    %v363 = vpop.f32.mrb[0].mxu0
    %v364 = vadd.f32 %v201, %v363
    %365 = vmatprep.mubr.f32.mxu0 0.0
    %366 = vmatmul.mubr.f32.gmra.mrb[0].mxu0 %v251
    %v367 = vpop.f32.mrb[0].mxu0
    %v368 = vadd.f32 %v197, %v367
    %v369 = vpop.f32.mrb[0].mxu0
    %v370 = vadd.f32 %v201, %v369
    %371 = vmatprep.mubr.f32.mxu0 0.0
    %372 = vmatmul.mubr.f32.gmra.mrb[0].mxu0 %v254
    %v373 = vpop.f32.mrb[0].mxu0
    %v374 = vadd.f32 %v197, %v373
    %v375 = vpop.f32.mrb[0].mxu0
    %v376 = vadd.f32 %v201, %v375
    %377 = vdwg.mxu0
    %378 = vmatprep.subr.mxu0 %v263
    %379 = vmatpush1.msra.mxu0 %v261
    %380 = vmatprep.subr.mxu0 0.0
    %381 = vmatpush1.msra.mxu0 0.0
    %382 = vmatprep.subr.mxu0 0.0
    %383 = vmatpush1.msra.mxu0 0.0
    %384 = vmatprep.subr.mxu0 0.0
    %385 = vmatpush1.msra.mxu0 0.0
    %386 = vmatprep.subr.mxu0 0.0
    %387 = vmatpush1.msra.mxu0 0.0
    %388 = vmatprep.subr.mxu0 0.0
    %389 = vmatpush1.msra.mxu0 0.0
    %390 = vmatprep.subr.mxu0 0.0
    %391 = vmatpush1.msra.mxu0 0.0
    %392 = vmatprep.subr.mxu0 0.0
    %393 = vmatpush1.msra.mxu0 0.0
    %394 = vmatprep.subr.mxu0 0.0
    %395 = vmatpush1.msra.mxu0 0.0
    %396 = vmatprep.subr.mxu0 0.0
    %397 = vmatpush1.msra.mxu0 0.0
    %398 = vmatprep.subr.mxu0 0.0
    %399 = vmatpush1.msra.mxu0 0.0
    %400 = vmatprep.subr.mxu0 0.0
    %401 = vmatpush1.msra.mxu0 0.0
    %402 = vmatprep.subr.mxu0 0.0
    %403 = vmatpush1.msra.mxu0 0.0
    %404 = vmatprep.subr.mxu0 0.0
    %405 = vmatpush1.msra.mxu0 0.0
    %406 = vmatprep.subr.mxu0 0.0
    %407 = vmatpush1.msra.mxu0 0.0
    %408 = vmatprep.subr.mxu0 0.0
    %409 = vmatpush1.msra.mxu0 0.0
    %410 = vmatprep.subr.mxu0 0.0
    %411 = vmatpush1.msra.mxu0 0.0
    %412 = vmatprep.subr.mxu0 0.0
    %413 = vmatpush1.msra.mxu0 0.0
    %414 = vmatprep.subr.mxu0 0.0
    %415 = vmatpush1.msra.mxu0 0.0
    %416 = vmatprep.subr.mxu0 0.0
    %417 = vmatpush1.msra.mxu0 0.0
    %418 = vmatprep.subr.mxu0 0.0
    %419 = vmatpush1.msra.mxu0 0.0
    %420 = vmatprep.subr.mxu0 0.0
    %421 = vmatpush1.msra.mxu0 0.0
    %422 = vmatprep.subr.mxu0 0.0
    %423 = vmatpush1.msra.mxu0 0.0
    %424 = vmatprep.subr.mxu0 0.0
    %425 = vmatpush1.msra.mxu0 0.0
    %426 = vmatprep.subr.mxu0 0.0
    %427 = vmatpush1.msra.mxu0 0.0
    %428 = vmatprep.subr.mxu0 0.0
    %429 = vmatpush1.msra.mxu0 0.0
    %430 = vmatprep.subr.mxu0 0.0
    %431 = vmatpush1.msra.mxu0 0.0
    %432 = vmatprep.subr.mxu0 0.0
    %433 = vmatpush1.msra.mxu0 0.0
    %434 = vmatprep.subr.mxu0 0.0
    %435 = vmatpush1.msra.mxu0 0.0
    %436 = vmatprep.subr.mxu0 0.0
    %437 = vmatpush1.msra.mxu0 0.0
    %438 = vmatprep.subr.mxu0 0.0
    %439 = vmatpush1.msra.mxu0 0.0
    %440 = vmatprep.subr.mxu0 0.0
    %441 = vmatpush1.msra.mxu0 0.0
    %442 = vmatprep.mubr.f32.mxu0 0.0
    %443 = vmatmul.mubr.f32.gmra.mrb[0].mxu0 %v233
    %v444 = vpop.f32.mrb[0].mxu0
    %v445 = vadd.f32 %v205, %v444
    %v446 = vpop.f32.mrb[0].mxu0
    %v447 = vadd.f32 %v209, %v446
    %448 = vmatprep.mubr.f32.mxu0 0.0
    %449 = vmatmul.mubr.f32.gmra.mrb[0].mxu0 %v236
    %v450 = vpop.f32.mrb[0].mxu0
    %v451 = vadd.f32 %v205, %v450
    %v452 = vpop.f32.mrb[0].mxu0
    %v453 = vadd.f32 %v209, %v452
    %454 = vmatprep.mubr.f32.mxu0 0.0
    %455 = vmatmul.mubr.f32.gmra.mrb[0].mxu0 %v239
    %v456 = vpop.f32.mrb[0].mxu0
    %v457 = vadd.f32 %v205, %v456
    %v458 = vpop.f32.mrb[0].mxu0
    %v459 = vadd.f32 %v209, %v458
    %460 = vmatprep.mubr.f32.mxu0 0.0
    %461 = vmatmul.mubr.f32.gmra.mrb[0].mxu0 %v242
    %v462 = vpop.f32.mrb[0].mxu0
    %v463 = vadd.f32 %v205, %v462
    %v464 = vpop.f32.mrb[0].mxu0
    %v465 = vadd.f32 %v209, %v464
    %466 = vmatprep.mubr.f32.mxu0 0.0
    %467 = vmatmul.mubr.f32.gmra.mrb[0].mxu0 %v245
    %v468 = vpop.f32.mrb[0].mxu0
    %v469 = vadd.f32 %v205, %v468
    %v470 = vpop.f32.mrb[0].mxu0
    %v471 = vadd.f32 %v209, %v470
    %472 = vmatprep.mubr.f32.mxu0 0.0
    %473 = vmatmul.mubr.f32.gmra.mrb[0].mxu0 %v248
    %v474 = vpop.f32.mrb[0].mxu0
    %v475 = vadd.f32 %v205, %v474
    %v476 = vpop.f32.mrb[0].mxu0
    %v477 = vadd.f32 %v209, %v476
    %478 = vmatprep.mubr.f32.mxu0 0.0
    %479 = vmatmul.mubr.f32.gmra.mrb[0].mxu0 %v251
    %v480 = vpop.f32.mrb[0].mxu0
    %v481 = vadd.f32 %v205, %v480
    %v482 = vpop.f32.mrb[0].mxu0
    %v483 = vadd.f32 %v209, %v482
    %484 = vmatprep.mubr.f32.mxu0 0.0
    %485 = vmatmul.mubr.f32.gmra.mrb[0].mxu0 %v254
    %v486 = vpop.f32.mrb[0].mxu0
    %v487 = vadd.f32 %v205, %v486
    %v488 = vpop.f32.mrb[0].mxu0
    %v489 = vadd.f32 %v209, %v488
    %490 = vdwg.mxu0
    %491 = vst [vmem:[#allocation7] sm:$0xff] %v332
    %492 = vst [vmem:[#allocation7 + $0x8] sm:$0xff] %v334
    %493 = vst [vmem:[#allocation7 + $0x10] sm:$0xff] %v445
    %494 = vst [vmem:[#allocation7 + $0x18] sm:$0xff] %v447
    %495 = vst [vmem:[#allocation7 + $0x20] sm:$0xff] %v338
    %496 = vst [vmem:[#allocation7 + $0x28] sm:$0xff] %v340
    %497 = vst [vmem:[#allocation7 + $0x30] sm:$0xff] %v451
    %498 = vst [vmem:[#allocation7 + $0x38] sm:$0xff] %v453
    %499 = vst [vmem:[#allocation7 + $0x40] sm:$0xff] %v344
    %500 = vst [vmem:[#allocation7 + $0x48] sm:$0xff] %v346
    %501 = vst [vmem:[#allocation7 + $0x50] sm:$0xff] %v457
    %502 = vst [vmem:[#allocation7 + $0x58] sm:$0xff] %v459
    %503 = vst [vmem:[#allocation7 + $0x60] sm:$0xff] %v350
    %504 = vst [vmem:[#allocation7 + $0x68] sm:$0xff] %v352
    %505 = vst [vmem:[#allocation7 + $0x70] sm:$0xff] %v463
    %506 = vst [vmem:[#allocation7 + $0x78] sm:$0xff] %v465
    %507 = vst [vmem:[#allocation7 + $0x80] sm:$0xff] %v356
    %508 = vst [vmem:[#allocation7 + $0x88] sm:$0xff] %v358
    %509 = vst [vmem:[#allocation7 + $0x90] sm:$0xff] %v469
    %510 = vst [vmem:[#allocation7 + $0x98] sm:$0xff] %v471
    %511 = vst [vmem:[#allocation7 + $0xa0] sm:$0xff] %v362
    %512 = vst [vmem:[#allocation7 + $0xa8] sm:$0xff] %v364
    %513 = vst [vmem:[#allocation7 + $0xb0] sm:$0xff] %v475
    %514 = vst [vmem:[#allocation7 + $0xb8] sm:$0xff] %v477
    %515 = vst [vmem:[#allocation7 + $0xc0] sm:$0xff] %v368
    %516 = vst [vmem:[#allocation7 + $0xc8] sm:$0xff] %v370
    %517 = vst [vmem:[#allocation7 + $0xd0] sm:$0xff] %v481
    %518 = vst [vmem:[#allocation7 + $0xd8] sm:$0xff] %v483
    %519 = vst [vmem:[#allocation7 + $0xe0] sm:$0xff] %v374
    %520 = vst [vmem:[#allocation7 + $0xe8] sm:$0xff] %v376
    %521 = vst [vmem:[#allocation7 + $0xf0] sm:$0xff] %v487
    %522 = vst [vmem:[#allocation7 + $0xf8] sm:$0xff] %v489
    // Predicated region
    $region108: #{tpu_custom_call.1} parent=1 // pred_check
      %p523 = pneg %p14
    $region109: #{tpu_custom_call.1} parent=1 // pred_check_branch
      %525 = sbr.rel (%p523) target = $region111
    $region110: #{tpu_custom_call.1} parent=1 // pred_region
      %s526 = scalar_lea.sflag [#allocation10], 2
      %s527 = smul.u32 8, 16
      %s528 = smul.u32 %s527, 4
      %s529 = sshll.u32 %s528, 4
      %530 = dma.done %s526, %s529
      %s531 = scalar_lea.sflag [#allocation10], 3
      %s532 = smul.u32 128, 1
      %s533 = sshll.u32 %s532, 4
      %534 = dma.done %s531, %s533
      %s535 = scalar_lea.sflag [#allocation10], 4
      %s536 = smul.u32 1, 1
      %s537 = sshll.u32 %s536, 4
      %538 = dma.done %s535, %s537
    $region111: #{tpu_custom_call.1} parent=1 // pred_fallthru
      _
    loop: start=0, step=1, limit=8
    $region112: #{tpu_custom_call.1} parent=1 // loop_pre_header
      _
    $region113: #{tpu_custom_call.1} parent=1 // loop_header
      %s540 = sphi 0, %s544
      %p541 = scmp.ge.s32.totalorder %s540, 8
    $region114: #{tpu_custom_call.1} parent=1 // loop_header_branch
      %543 = sbr.rel (%p541) target = $region118
    $region115: #{tpu_custom_call.1} parent=1 // loop_body
      %v545 = vld [vmem:[#allocation8] sm:$0xff]
      %v546 = vld [vmem:[#allocation9] sm:$0xff]
      %s547 = smul.u32 %s540, 8
      %s548 = sshra.s32 %s547, 3
      %s549 = sand.u32 %s547, 7
      %s550 = smul.u32 %s548, 4
      %s551 = smul.addr %s550, 8
      %s552 = scalar_lea.vmem [#allocation7], %s551
      %v553 = vld [vmem:[%s552] sm:$0xff]
      %v554 = vld [vmem:[%s552 + $0x8] sm:$0xff]
      %v555 = vld [vmem:[%s552 + $0x10] sm:$0xff]
      %v556 = vld [vmem:[%s552 + $0x18] sm:$0xff]
      %v557 = vld [vmem:[#allocation3] sm:$0xff]
      %v558 = vld [vmem:[#allocation3 + $0x8] sm:$0xff]
      %v559 = vld [vmem:[#allocation3 + $0x10] sm:$0xff]
      %v560 = vld [vmem:[#allocation3 + $0x18] sm:$0xff]
      %v561 = vld [vmem:[#allocation3 + $0x20] sm:$0xff]
      %v562 = vld [vmem:[#allocation3 + $0x28] sm:$0xff]
      %v563 = vld [vmem:[#allocation3 + $0x30] sm:$0xff]
      %v564 = vld [vmem:[#allocation3 + $0x38] sm:$0xff]
      %v565 = vld [vmem:[#allocation3 + $0x40] sm:$0xff]
      %v566 = vld [vmem:[#allocation3 + $0x48] sm:$0xff]
      %v567 = vld [vmem:[#allocation3 + $0x50] sm:$0xff]
      %v568 = vld [vmem:[#allocation3 + $0x58] sm:$0xff]
      %v569 = vld [vmem:[#allocation3 + $0x60] sm:$0xff]
      %v570 = vld [vmem:[#allocation3 + $0x68] sm:$0xff]
      %v571 = vld [vmem:[#allocation3 + $0x70] sm:$0xff]
      %v572 = vld [vmem:[#allocation3 + $0x78] sm:$0xff]
      %v573 = vld [vmem:[#allocation3 + $0x80] sm:$0xff]
      %v574 = vld [vmem:[#allocation3 + $0x88] sm:$0xff]
      %v575 = vld [vmem:[#allocation3 + $0x90] sm:$0xff]
      %v576 = vld [vmem:[#allocation3 + $0x98] sm:$0xff]
      %v577 = vld [vmem:[#allocation3 + $0xa0] sm:$0xff]
      %v578 = vld [vmem:[#allocation3 + $0xa8] sm:$0xff]
      %v579 = vld [vmem:[#allocation3 + $0xb0] sm:$0xff]
      %v580 = vld [vmem:[#allocation3 + $0xb8] sm:$0xff]
      %v581 = vld [vmem:[#allocation3 + $0xc0] sm:$0xff]
      %v582 = vld [vmem:[#allocation3 + $0xc8] sm:$0xff]
      %v583 = vld [vmem:[#allocation3 + $0xd0] sm:$0xff]
      %v584 = vld [vmem:[#allocation3 + $0xd8] sm:$0xff]
      %v585 = vld [vmem:[#allocation3 + $0xe0] sm:$0xff]
      %v586 = vld [vmem:[#allocation3 + $0xe8] sm:$0xff]
      %v587 = vld [vmem:[#allocation3 + $0xf0] sm:$0xff]
      %v588 = vld [vmem:[#allocation3 + $0xf8] sm:$0xff]
      %v589 = vld [vmem:[#allocation3 + $0x100] sm:$0xff]
      %v590 = vld [vmem:[#allocation3 + $0x108] sm:$0xff]
      %v591 = vld [vmem:[#allocation3 + $0x110] sm:$0xff]
      %v592 = vld [vmem:[#allocation3 + $0x118] sm:$0xff]
      %v593 = vld [vmem:[#allocation3 + $0x120] sm:$0xff]
      %v594 = vld [vmem:[#allocation3 + $0x128] sm:$0xff]
      %v595 = vld [vmem:[#allocation3 + $0x130] sm:$0xff]
      %v596 = vld [vmem:[#allocation3 + $0x138] sm:$0xff]
      %v597 = vld [vmem:[#allocation3 + $0x140] sm:$0xff]
      %v598 = vld [vmem:[#allocation3 + $0x148] sm:$0xff]
      %v599 = vld [vmem:[#allocation3 + $0x150] sm:$0xff]
      %v600 = vld [vmem:[#allocation3 + $0x158] sm:$0xff]
      %v601 = vld [vmem:[#allocation3 + $0x160] sm:$0xff]
      %v602 = vld [vmem:[#allocation3 + $0x168] sm:$0xff]
      %v603 = vld [vmem:[#allocation3 + $0x170] sm:$0xff]
      %v604 = vld [vmem:[#allocation3 + $0x178] sm:$0xff]
      %v605 = vld [vmem:[#allocation3 + $0x180] sm:$0xff]
      %v606 = vld [vmem:[#allocation3 + $0x188] sm:$0xff]
      %v607 = vld [vmem:[#allocation3 + $0x190] sm:$0xff]
      %v608 = vld [vmem:[#allocation3 + $0x198] sm:$0xff]
      %v609 = vld [vmem:[#allocation3 + $0x1a0] sm:$0xff]
      %v610 = vld [vmem:[#allocation3 + $0x1a8] sm:$0xff]
      %v611 = vld [vmem:[#allocation3 + $0x1b0] sm:$0xff]
      %v612 = vld [vmem:[#allocation3 + $0x1b8] sm:$0xff]
      %v613 = vld [vmem:[#allocation3 + $0x1c0] sm:$0xff]
      %v614 = vld [vmem:[#allocation3 + $0x1c8] sm:$0xff]
      %v615 = vld [vmem:[#allocation3 + $0x1d0] sm:$0xff]
      %v616 = vld [vmem:[#allocation3 + $0x1d8] sm:$0xff]
      %v617 = vld [vmem:[#allocation3 + $0x1e0] sm:$0xff]
      %v618 = vld [vmem:[#allocation3 + $0x1e8] sm:$0xff]
      %v619 = vld [vmem:[#allocation3 + $0x1f0] sm:$0xff]
      %v620 = vld [vmem:[#allocation3 + $0x1f8] sm:$0xff]
      %621 = vmatprep.subr.mxu0 %v558
      %622 = vmatpush1.msra.mxu0 %v557
      %623 = vmatprep.subr.mxu0 %v562
      %624 = vmatpush1.msra.mxu0 %v561
      %625 = vmatprep.subr.mxu0 %v566
      %626 = vmatpush1.msra.mxu0 %v565
      %627 = vmatprep.subr.mxu0 %v570
      %628 = vmatpush1.msra.mxu0 %v569
      %629 = vmatprep.subr.mxu0 %v574
      %630 = vmatpush1.msra.mxu0 %v573
      %631 = vmatprep.subr.mxu0 %v578
      %632 = vmatpush1.msra.mxu0 %v577
      %633 = vmatprep.subr.mxu0 %v582
      %634 = vmatpush1.msra.mxu0 %v581
      %635 = vmatprep.subr.mxu0 %v586
      %636 = vmatpush1.msra.mxu0 %v585
      %637 = vmatprep.subr.mxu0 %v590
      %638 = vmatpush1.msra.mxu0 %v589
      %639 = vmatprep.subr.mxu0 %v594
      %640 = vmatpush1.msra.mxu0 %v593
      %641 = vmatprep.subr.mxu0 %v598
      %642 = vmatpush1.msra.mxu0 %v597
      %643 = vmatprep.subr.mxu0 %v602
      %644 = vmatpush1.msra.mxu0 %v601
      %645 = vmatprep.subr.mxu0 %v606
      %646 = vmatpush1.msra.mxu0 %v605
      %647 = vmatprep.subr.mxu0 %v610
      %648 = vmatpush1.msra.mxu0 %v609
      %649 = vmatprep.subr.mxu0 %v614
      %650 = vmatpush1.msra.mxu0 %v613
      %651 = vmatprep.subr.mxu0 %v618
      %652 = vmatpush1.msra.mxu0 %v617
      %653 = vmatprep.subr.mxu0 0.0
      %654 = vmatpush1.msra.mxu0 0.0
      %655 = vmatprep.subr.mxu0 0.0
      %656 = vmatpush1.msra.mxu0 0.0
      %657 = vmatprep.subr.mxu0 0.0
      %658 = vmatpush1.msra.mxu0 0.0
      %659 = vmatprep.subr.mxu0 0.0
      %660 = vmatpush1.msra.mxu0 0.0
      %661 = vmatprep.subr.mxu0 0.0
      %662 = vmatpush1.msra.mxu0 0.0
      %663 = vmatprep.subr.mxu0 0.0
      %664 = vmatpush1.msra.mxu0 0.0
      %665 = vmatprep.subr.mxu0 0.0
      %666 = vmatpush1.msra.mxu0 0.0
      %667 = vmatprep.subr.mxu0 0.0
      %668 = vmatpush1.msra.mxu0 0.0
      %669 = vmatprep.subr.mxu0 0.0
      %670 = vmatpush1.msra.mxu0 0.0
      %671 = vmatprep.subr.mxu0 0.0
      %672 = vmatpush1.msra.mxu0 0.0
      %673 = vmatprep.subr.mxu0 0.0
      %674 = vmatpush1.msra.mxu0 0.0
      %675 = vmatprep.subr.mxu0 0.0
      %676 = vmatpush1.msra.mxu0 0.0
      %677 = vmatprep.subr.mxu0 0.0
      %678 = vmatpush1.msra.mxu0 0.0
      %679 = vmatprep.subr.mxu0 0.0
      %680 = vmatpush1.msra.mxu0 0.0
      %681 = vmatprep.subr.mxu0 0.0
      %682 = vmatpush1.msra.mxu0 0.0
      %683 = vmatprep.subr.mxu0 0.0
      %684 = vmatpush1.msra.mxu0 0.0
      %685 = vmatprep.mubr.f32.mxu0 0.0
      %686 = vmatmul.mubr.f32.gmra.mrb[0].mxu0 %v545
      %v687 = vpop.f32.mrb[0].mxu0
      %v688 = vadd.f32 0.0, %v687
      %v689 = vpop.f32.mrb[0].mxu0
      %v690 = vadd.f32 0.0, %v689
      %691 = vdwg.mxu0
      %692 = vmatprep.subr.mxu0 %v560
      %693 = vmatpush1.msra.mxu0 %v559
      %694 = vmatprep.subr.mxu0 %v564
      %695 = vmatpush1.msra.mxu0 %v563
      %696 = vmatprep.subr.mxu0 %v568
      %697 = vmatpush1.msra.mxu0 %v567
      %698 = vmatprep.subr.mxu0 %v572
      %699 = vmatpush1.msra.mxu0 %v571
      %700 = vmatprep.subr.mxu0 %v576
      %701 = vmatpush1.msra.mxu0 %v575
      %702 = vmatprep.subr.mxu0 %v580
      %703 = vmatpush1.msra.mxu0 %v579
      %704 = vmatprep.subr.mxu0 %v584
      %705 = vmatpush1.msra.mxu0 %v583
      %706 = vmatprep.subr.mxu0 %v588
      %707 = vmatpush1.msra.mxu0 %v587
      %708 = vmatprep.subr.mxu0 %v592
      %709 = vmatpush1.msra.mxu0 %v591
      %710 = vmatprep.subr.mxu0 %v596
      %711 = vmatpush1.msra.mxu0 %v595
      %712 = vmatprep.subr.mxu0 %v600
      %713 = vmatpush1.msra.mxu0 %v599
      %714 = vmatprep.subr.mxu0 %v604
      %715 = vmatpush1.msra.mxu0 %v603
      %716 = vmatprep.subr.mxu0 %v608
      %717 = vmatpush1.msra.mxu0 %v607
      %718 = vmatprep.subr.mxu0 %v612
      %719 = vmatpush1.msra.mxu0 %v611
      %720 = vmatprep.subr.mxu0 %v616
      %721 = vmatpush1.msra.mxu0 %v615
      %722 = vmatprep.subr.mxu0 %v620
      %723 = vmatpush1.msra.mxu0 %v619
      %724 = vmatprep.subr.mxu0 0.0
      %725 = vmatpush1.msra.mxu0 0.0
      %726 = vmatprep.subr.mxu0 0.0
      %727 = vmatpush1.msra.mxu0 0.0
      %728 = vmatprep.subr.mxu0 0.0
      %729 = vmatpush1.msra.mxu0 0.0
      %730 = vmatprep.subr.mxu0 0.0
      %731 = vmatpush1.msra.mxu0 0.0
      %732 = vmatprep.subr.mxu0 0.0
      %733 = vmatpush1.msra.mxu0 0.0
      %734 = vmatprep.subr.mxu0 0.0
      %735 = vmatpush1.msra.mxu0 0.0
      %736 = vmatprep.subr.mxu0 0.0
      %737 = vmatpush1.msra.mxu0 0.0
      %738 = vmatprep.subr.mxu0 0.0
      %739 = vmatpush1.msra.mxu0 0.0
      %740 = vmatprep.subr.mxu0 0.0
      %741 = vmatpush1.msra.mxu0 0.0
      %742 = vmatprep.subr.mxu0 0.0
      %743 = vmatpush1.msra.mxu0 0.0
      %744 = vmatprep.subr.mxu0 0.0
      %745 = vmatpush1.msra.mxu0 0.0
      %746 = vmatprep.subr.mxu0 0.0
      %747 = vmatpush1.msra.mxu0 0.0
      %748 = vmatprep.subr.mxu0 0.0
      %749 = vmatpush1.msra.mxu0 0.0
      %750 = vmatprep.subr.mxu0 0.0
      %751 = vmatpush1.msra.mxu0 0.0
      %752 = vmatprep.subr.mxu0 0.0
      %753 = vmatpush1.msra.mxu0 0.0
      %754 = vmatprep.subr.mxu0 0.0
      %755 = vmatpush1.msra.mxu0 0.0
      %756 = vmatprep.mubr.f32.mxu0 0.0
      %757 = vmatmul.mubr.f32.gmra.mrb[0].mxu0 %v545
      %v758 = vpop.f32.mrb[0].mxu0
      %v759 = vadd.f32 0.0, %v758
      %v760 = vpop.f32.mrb[0].mxu0
      %v761 = vadd.f32 0.0, %v760
      %762 = vdwg.mxu0
      %v763 = vadd.f32 %v553, %v688
      %v764 = vadd.f32 %v554, %v690
      %v765 = vadd.f32 %v555, %v759
      %v766 = vadd.f32 %v556, %v761
      %v767 = vmul.f32 %v763, 0.5
      %v768 = vtanh.pop %v767
      %v769 = vadd.f32 %v768, 1.0
      %v770 = vmul.f32 %v769, 0.5
      %v771 = vmul.f32 %v764, 0.5
      %v772 = vtanh.pop %v771
      %v773 = vadd.f32 %v772, 1.0
      %v774 = vmul.f32 %v773, 0.5
      %v775 = vtanh.pop %v765
      %v776 = vmul.f32 %v766, 0.5
      %v777 = vtanh.pop %v776
      %v778 = vadd.f32 %v777, 1.0
      %v779 = vmul.f32 %v778, 0.5
      %v780 = vmul.f32 %v774, %v546
      %v781 = vmul.f32 %v770, %v775
      %v782 = vadd.f32 %v780, %v781
      %v783 = vtanh.pop %v782
      %v784 = vmul.f32 %v779, %v783
      %785 = vst [vmem:[#allocation9] sm:$0xff] %v782
      %786 = vst [vmem:[#allocation8] sm:$0xff] %v784
    $region116: #{tpu_custom_call.1} parent=1 // loop_footer
      %s544 = sadd.s32 1, %s540
    $region117: #{tpu_custom_call.1} parent=1 // loop_footer_branch
      %539 = sbr.rel target = $region113
    $region118: #{tpu_custom_call.1} parent=1 // loop_exit
      _
    // Predicated region
    $region119: #{tpu_custom_call.1} parent=1 // pred_check
      %p787 = pneg %p14
    $region120: #{tpu_custom_call.1} parent=1 // pred_check_branch
      %789 = sbr.rel (%p787) target = $region122
    $region121: #{tpu_custom_call.1} parent=1 // pred_region
      %v790 = vld [vmem:[#allocation8] sm:$0xff]
      %v791 = vld [vmem:[#allocation5] sm:$0xff]
      %v792 = vld [vmem:[#allocation5 + $0x8] sm:$0xff]
      %v793 = vld [vmem:[#allocation5 + $0x10] sm:$0xff]
      %v794 = vld [vmem:[#allocation5 + $0x18] sm:$0xff]
      %v795 = vld [vmem:[#allocation5 + $0x20] sm:$0xff]
      %v796 = vld [vmem:[#allocation5 + $0x28] sm:$0xff]
      %v797 = vld [vmem:[#allocation5 + $0x30] sm:$0xff]
      %v798 = vld [vmem:[#allocation5 + $0x38] sm:$0xff]
      %v799 = vld [vmem:[#allocation5 + $0x40] sm:$0xff]
      %v800 = vld [vmem:[#allocation5 + $0x48] sm:$0xff]
      %v801 = vld [vmem:[#allocation5 + $0x50] sm:$0xff]
      %v802 = vld [vmem:[#allocation5 + $0x58] sm:$0xff]
      %v803 = vld [vmem:[#allocation5 + $0x60] sm:$0xff]
      %v804 = vld [vmem:[#allocation5 + $0x68] sm:$0xff]
      %v805 = vld [vmem:[#allocation5 + $0x70] sm:$0xff]
      %v806 = vld [vmem:[#allocation5 + $0x78] sm:$0xff]
      %v807 = vld [vmem:[#allocation6] sm:$0x1]
      %v809 = vlaneseq
      %v810 = vshrl.u32 %v809, 7
      %v811 = vsub.s32 0, %v810
      %v812 = vrot.slane %v807, %v811
      %814 = vmatprep.subr.mxu0 0.0
      %815 = vmatpush1.msra.mxu0 %v791
      %816 = vmatprep.subr.mxu0 0.0
      %817 = vmatpush1.msra.mxu0 %v792
      %818 = vmatprep.subr.mxu0 0.0
      %819 = vmatpush1.msra.mxu0 %v793
      %820 = vmatprep.subr.mxu0 0.0
      %821 = vmatpush1.msra.mxu0 %v794
      %822 = vmatprep.subr.mxu0 0.0
      %823 = vmatpush1.msra.mxu0 %v795
      %824 = vmatprep.subr.mxu0 0.0
      %825 = vmatpush1.msra.mxu0 %v796
      %826 = vmatprep.subr.mxu0 0.0
      %827 = vmatpush1.msra.mxu0 %v797
      %828 = vmatprep.subr.mxu0 0.0
      %829 = vmatpush1.msra.mxu0 %v798
      %830 = vmatprep.subr.mxu0 0.0
      %831 = vmatpush1.msra.mxu0 %v799
      %832 = vmatprep.subr.mxu0 0.0
      %833 = vmatpush1.msra.mxu0 %v800
      %834 = vmatprep.subr.mxu0 0.0
      %835 = vmatpush1.msra.mxu0 %v801
      %836 = vmatprep.subr.mxu0 0.0
      %837 = vmatpush1.msra.mxu0 %v802
      %838 = vmatprep.subr.mxu0 0.0
      %839 = vmatpush1.msra.mxu0 %v803
      %840 = vmatprep.subr.mxu0 0.0
      %841 = vmatpush1.msra.mxu0 %v804
      %842 = vmatprep.subr.mxu0 0.0
      %843 = vmatpush1.msra.mxu0 %v805
      %844 = vmatprep.subr.mxu0 0.0
      %845 = vmatpush1.msra.mxu0 %v806
      %846 = vmatprep.subr.mxu0 0.0
      %847 = vmatpush1.msra.mxu0 0.0
      %848 = vmatprep.subr.mxu0 0.0
      %849 = vmatpush1.msra.mxu0 0.0
      %850 = vmatprep.subr.mxu0 0.0
      %851 = vmatpush1.msra.mxu0 0.0
      %852 = vmatprep.subr.mxu0 0.0
      %853 = vmatpush1.msra.mxu0 0.0
      %854 = vmatprep.subr.mxu0 0.0
      %855 = vmatpush1.msra.mxu0 0.0
      %856 = vmatprep.subr.mxu0 0.0
      %857 = vmatpush1.msra.mxu0 0.0
      %858 = vmatprep.subr.mxu0 0.0
      %859 = vmatpush1.msra.mxu0 0.0
      %860 = vmatprep.subr.mxu0 0.0
      %861 = vmatpush1.msra.mxu0 0.0
      %862 = vmatprep.subr.mxu0 0.0
      %863 = vmatpush1.msra.mxu0 0.0
      %864 = vmatprep.subr.mxu0 0.0
      %865 = vmatpush1.msra.mxu0 0.0
      %866 = vmatprep.subr.mxu0 0.0
      %867 = vmatpush1.msra.mxu0 0.0
      %868 = vmatprep.subr.mxu0 0.0
      %869 = vmatpush1.msra.mxu0 0.0
      %870 = vmatprep.subr.mxu0 0.0
      %871 = vmatpush1.msra.mxu0 0.0
      %872 = vmatprep.subr.mxu0 0.0
      %873 = vmatpush1.msra.mxu0 0.0
      %874 = vmatprep.subr.mxu0 0.0
      %875 = vmatpush1.msra.mxu0 0.0
      %876 = vmatprep.subr.mxu0 0.0
      %877 = vmatpush1.msra.mxu0 0.0
      %878 = vmatprep.mubr.f32.mxu0 0.0
      %879 = vmatmul.mubr.f32.gmra.mrb[0].mxu0 %v790
      %v880 = vpop.f32.mrb[0].mxu0
      %v881 = vadd.f32 %v812, %v880
      %v882 = vpop.f32.mrb[0].mxu0
      %883 = vdwg.mxu0
      %884 = vst [vmem:[#allocation11] sm:$0xff] %v881
    $region122: #{tpu_custom_call.1} parent=1 // pred_fallthru
      _
    // Predicated region
    $region123: #{tpu_custom_call.1} parent=1 // pred_check
      _
    $region124: #{tpu_custom_call.1} parent=1 // pred_check_branch
      %886 = sbr.rel (0) target = $region126
    $region125: #{tpu_custom_call.1} parent=1 // pred_region
      %s888 = ssub.s32 128, 128
      %889 = vsyncadd [#allocation12], %s888
      %s891 = sshll.u32 [#allocation11], 4
      %s892 = int_to_ptr.vmem [resolvable:$true] %s891
      %894 = dma.vmem_to_hbm [thread:$0]  %s892, 128, %s6, [#allocation12]
    $region126: #{tpu_custom_call.1} parent=1 // pred_fallthru
      _
    // Predicated region
    $region127: #{tpu_custom_call.1} parent=1 // pred_check
      _
    $region128: #{tpu_custom_call.1} parent=1 // pred_check_branch
      %896 = sbr.rel (0) target = $region130
    $region129: #{tpu_custom_call.1} parent=1 // pred_region
      %897 = dma.done [#allocation12], 128
    $region130: #{tpu_custom_call.1} parent=1 // pred_fallthru
      _
    %898 = vsyncpa [#allocation12], 1
  %899 = vsyncmov [#allocation10]
  %s900 = vpop.sfrf %899
  %p901 = scmp.eq.s32.totalorder %s900, 0
  %p902 = pneg %p901
  %904 = shalt.err (%p902)
  %s905 = scalar_lea.sflag [#allocation10], 1
  %906 = vsyncmov %s905
  %s907 = vpop.sfrf %906
  %p908 = scmp.eq.s32.totalorder %s907, 0
  %p909 = pneg %p908
  %911 = shalt.err (%p909)
  %s912 = scalar_lea.sflag [#allocation10], 2
  %913 = vsyncmov %s912
  %s914 = vpop.sfrf %913
  %p915 = scmp.eq.s32.totalorder %s914, 0
  %p916 = pneg %p915
  %918 = shalt.err (%p916)
  %s919 = scalar_lea.sflag [#allocation10], 3
  %920 = vsyncmov %s919
  %s921 = vpop.sfrf %920
  %p922 = scmp.eq.s32.totalorder %s921, 0
  %p923 = pneg %p922
  %925 = shalt.err (%p923)
  %s926 = scalar_lea.sflag [#allocation10], 4
  %927 = vsyncmov %s926
  %s928 = vpop.sfrf %927
  %p929 = scmp.eq.s32.totalorder %s928, 0
  %p930 = pneg %p929
  %932 = shalt.err (%p930)

</llo_original>
